<compile_context>
chip_gen: v7x
topology: tpu7x:2x2x1
jax: 0.10.0
libtpu: 0.0.40
codegen_flags: <defaults>
</compile_context>

<pallas_src>
import jax
import jax.numpy as jnp
import numpy as np
from jax.experimental import pallas as pl
from jax.experimental.pallas import tpu as pltpu


def _lstm_fc_kernel(x_ref, h0_ref, c0_ref, w_ih_ref, w_hh_ref, b_ref,
                    w_fc_ref, b_fc_ref,
                    y_ref, h_out_ref, c_out_ref):
    B, T, I = x_ref.shape
    H = h0_ref.shape[1]

    # ---- input projection, hoisted out of the recurrence: one MXU matmul ----
    # Rows are batch-major (row index = b*T + t); gate order along 4H is i, f, g, o.
    x2 = x_ref[...].reshape(B * T, I)                    # leading-dim collapse (free)
    xg = (jnp.dot(x2, w_ih_ref[...], preferred_element_type=jnp.float32)
          + b_ref[...])                                  # (B*T, 4H)
    xg3 = xg.reshape(B, T, 4 * H)                        # tile-aligned leading split

    w_hh = w_hh_ref[...]                                 # (H, 4H), loaded once
    h = h0_ref[...].astype(jnp.float32)                  # (B, H)
    c = c0_ref[...].astype(jnp.float32)                  # (B, H)

    # Statically unrolled recurrence; h/c live in registers. One fused lane-full
    # (B, H) @ (H, 4H) MXU push per step on the serial chain; one wide sigmoid EUP
    # push covers the i/f/o lanes.
    hs = []
    for t in range(T):
        gates = xg3[:, t, :] + jnp.dot(h, w_hh, preferred_element_type=jnp.float32)
        sg = jax.nn.sigmoid(gates)                       # (B, 4H), one vreg wide
        i_g = sg[:, 0 * H:1 * H]
        f_g = sg[:, 1 * H:2 * H]
        o_g = sg[:, 3 * H:4 * H]
        g_g = jnp.tanh(gates[:, 2 * H:3 * H])
        c = f_g * c + i_g * g_g
        h = o_g * jnp.tanh(c)
        hs.append(h)                                     # register-carried, no VMEM scratch

    # ---- fused fc head: assemble hidden sequence once, one matmul, one store ----
    h_seq = jnp.stack(hs, axis=1).reshape(B * T, H)      # batch-major (B*T, H)
    y = (jnp.dot(h_seq, w_fc_ref[...], preferred_element_type=jnp.float32)
         + b_fc_ref[...])                                # (B*T, O)
    y_ref[...] = y.reshape(B, T, -1).astype(y_ref.dtype)
    h_out_ref[...] = h.astype(h_out_ref.dtype)
    c_out_ref[...] = c.astype(c_out_ref.dtype)


def value_network_forward(x, hidden, params):
    """x: (B, T, in_size) batch-first (PyTorch convention).
    hidden: (h0, c0), each (1, B, H).
    Returns (y, (h_T, c_T)) with y: (B, T, out_size), h_T/c_T: (1, B, H)."""
    h0, c0 = hidden
    w_ih, w_hh, b, w_fc, b_fc = params      # (in,4H), (H,4H), (1,4H), (H,out), (1,out)
    B, T, _ = x.shape
    H = w_hh.shape[0]
    O = w_fc.shape[1]

    vmem = pl.BlockSpec(memory_space=pltpu.MemorySpace.VMEM)   # whole array, VMEM-resident

    y, h_T, c_T = pl.pallas_call(
        _lstm_fc_kernel,
        out_shape=(
            jax.ShapeDtypeStruct((B, T, O), x.dtype),
            jax.ShapeDtypeStruct((B, H), x.dtype),
            jax.ShapeDtypeStruct((B, H), x.dtype),
        ),
        in_specs=[vmem] * 8,
        out_specs=(vmem, vmem, vmem),
    )(x, h0[0], c0[0], w_ih, w_hh, b, w_fc, b_fc)

    # Note: no megacore/grid split — at this B/H the recurrence is latency-bound and
    # splitting batch across TensorCores would only duplicate weight DMA.
    return y, (h_T[None], c_T[None])


def _reference_forward(x, hidden, params):
    """Pure-JAX reference matching PyTorch nn.LSTM + nn.Linear semantics."""
    h0, c0 = hidden
    w_ih, w_hh, b, w_fc, b_fc = params
    B, T, I = x.shape
    H = w_hh.shape[0]
    h, c = h0[0], c0[0]
    ys = []
    for t in range(T):
        gates = x[:, t] @ w_ih + h @ w_hh + b
        i_g = jax.nn.sigmoid(gates[:, 0 * H:1 * H])
        f_g = jax.nn.sigmoid(gates[:, 1 * H:2 * H])
        g_g = jnp.tanh(gates[:, 2 * H:3 * H])
        o_g = jax.nn.sigmoid(gates[:, 3 * H:4 * H])
        c = f_g * c + i_g * g_g
        h = o_g * jnp.tanh(c)
        ys.append(h @ w_fc + b_fc)
    y = jnp.stack(ys, axis=1)
    return y, (h[None], c[None])


def init_params(key, in_size, hidden_size, out_size):
    """Deterministic init, PyTorch-style U(-1/sqrt(H), 1/sqrt(H)).
    w_hh is kept in the (H, 4H) layout the kernel consumes — no per-call relayout."""
    k = 1.0 / np.sqrt(hidden_size)
    keys = jax.random.split(key, 6)
    w_ih = jax.random.uniform(keys[0], (in_size, 4 * hidden_size), jnp.float32, -k, k)
    w_hh = jax.random.uniform(keys[1], (hidden_size, 4 * hidden_size), jnp.float32, -k, k)
    b_ih = jax.random.uniform(keys[2], (1, 4 * hidden_size), jnp.float32, -k, k)
    b_hh = jax.random.uniform(keys[3], (1, 4 * hidden_size), jnp.float32, -k, k)
    w_fc = jax.random.uniform(keys[4], (hidden_size, out_size), jnp.float32, -k, k)
    b_fc = jax.random.uniform(keys[5], (1, out_size), jnp.float32, -k, k)
    return (w_ih, w_hh, b_ih + b_hh, w_fc, b_fc)


if __name__ == "__main__":
    B, T, IN, HID, OUT = 2, 8, 16, 32, 1

    key = jax.random.PRNGKey(0)
    kx, kh, kc, kp = jax.random.split(key, 4)
    x = jax.random.normal(kx, (B, T, IN), jnp.float32)
    h0 = jax.random.normal(kh, (1, B, HID), jnp.float32)
    c0 = jax.random.normal(kc, (1, B, HID), jnp.float32)
    params = init_params(kp, IN, HID, OUT)

    forward = jax.jit(value_network_forward)   # one program: no stray wrapper HLOs
    y, (h_T, c_T) = forward(x, (h0, c0), params)
    jax.block_until_ready((y, h_T, c_T))

    y_ref, (h_ref, c_ref) = _reference_forward(x, (h0, c0), params)
    np.testing.assert_allclose(np.asarray(y), np.asarray(y_ref), rtol=1e-5, atol=1e-5)
    np.testing.assert_allclose(np.asarray(h_T), np.asarray(h_ref), rtol=1e-5, atol=1e-5)
    np.testing.assert_allclose(np.asarray(c_T), np.asarray(c_ref), rtol=1e-5, atol=1e-5)

    print("KERNEL_OK")
</pallas_src>

<mosaic_0001>
module attributes {stable_mosaic.version = 11 : i64} {
  func.func @_lstm_fc_kernel(%arg0: memref<2x8x16xf32, #tpu.memory_space<vmem>>, %arg1: memref<2x32xf32, #tpu.memory_space<vmem>>, %arg2: memref<2x32xf32, #tpu.memory_space<vmem>>, %arg3: memref<16x128xf32, #tpu.memory_space<vmem>>, %arg4: memref<32x128xf32, #tpu.memory_space<vmem>>, %arg5: memref<1x128xf32, #tpu.memory_space<vmem>>, %arg6: memref<32x1xf32, #tpu.memory_space<vmem>>, %arg7: memref<1x1xf32, #tpu.memory_space<vmem>>, %arg8: memref<2x8x1xf32, #tpu.memory_space<vmem>>, %arg9: memref<2x32xf32, #tpu.memory_space<vmem>>, %arg10: memref<2x32xf32, #tpu.memory_space<vmem>>) attributes {dimension_semantics = [], scalar_prefetch = 0 : i64, scratch_operands = 0 : i64, tpu.core_type = #tpu.core_type<tc>} {
    %c0 = arith.constant 0 : index
    %c0_0 = arith.constant 0 : index
    %c0_1 = arith.constant 0 : index
    %0 = vector.load %arg0[%c0, %c0_0, %c0_1] : memref<2x8x16xf32, #tpu.memory_space<vmem>>, vector<2x8x16xf32>
    %1 = vector.shape_cast %0 : vector<2x8x16xf32> to vector<16x16xf32>
    %c0_2 = arith.constant 0 : index
    %c0_3 = arith.constant 0 : index
    %2 = vector.load %arg3[%c0_2, %c0_3] : memref<16x128xf32, #tpu.memory_space<vmem>>, vector<16x128xf32>
    %cst = arith.constant dense<0.000000e+00> : vector<16x128xf32>
    %3 = tpu.matmul %1, %2, %cst {dimension_numbers = #tpu.dot_dimension_numbers<[1], [0], [0], [1], [0, 0, 1, 1], [], []>} : vector<16x16xf32>, vector<16x128xf32>, vector<16x128xf32> -> vector<16x128xf32>
    %c0_4 = arith.constant 0 : index
    %c0_5 = arith.constant 0 : index
    %4 = vector.load %arg5[%c0_4, %c0_5] : memref<1x128xf32, #tpu.memory_space<vmem>>, vector<1x128xf32>
    %5 = vector.broadcast %4 : vector<1x128xf32> to vector<16x128xf32>
    %6 = arith.addf %3, %5 : vector<16x128xf32>
    %7 = vector.shape_cast %6 : vector<16x128xf32> to vector<2x8x128xf32>
    %c0_6 = arith.constant 0 : index
    %c0_7 = arith.constant 0 : index
    %8 = vector.load %arg4[%c0_6, %c0_7] : memref<32x128xf32, #tpu.memory_space<vmem>>, vector<32x128xf32>
    %c0_8 = arith.constant 0 : index
    %c0_9 = arith.constant 0 : index
    %9 = vector.load %arg1[%c0_8, %c0_9] : memref<2x32xf32, #tpu.memory_space<vmem>>, vector<2x32xf32>
    %c0_10 = arith.constant 0 : index
    %c0_11 = arith.constant 0 : index
    %10 = vector.load %arg2[%c0_10, %c0_11] : memref<2x32xf32, #tpu.memory_space<vmem>>, vector<2x32xf32>
    %11 = vector.extract_strided_slice %7 {offsets = [0, 0, 0], sizes = [2, 1, 128], strides = [1, 1, 1]} : vector<2x8x128xf32> to vector<2x1x128xf32>
    %12 = vector.shape_cast %11 : vector<2x1x128xf32> to vector<2x128xf32>
    %cst_12 = arith.constant dense<0.000000e+00> : vector<2x128xf32>
    %13 = tpu.matmul %9, %8, %cst_12 {dimension_numbers = #tpu.dot_dimension_numbers<[1], [0], [0], [1], [0, 0, 1, 1], [], []>} : vector<2x32xf32>, vector<32x128xf32>, vector<2x128xf32> -> vector<2x128xf32>
    %14 = arith.addf %12, %13 : vector<2x128xf32>
    %15 = arith.negf %14 : vector<2x128xf32>
    %16 = math.exp %15 : vector<2x128xf32>
    %cst_13 = arith.constant 1.000000e+00 : f32
    %17 = vector.broadcast %cst_13 : f32 to vector<2x128xf32>
    %18 = arith.addf %17, %16 : vector<2x128xf32>
    %19 = arith.divf %17, %18 : vector<2x128xf32>
    %20 = vector.extract_strided_slice %19 {offsets = [0, 0], sizes = [2, 32], strides = [1, 1]} : vector<2x128xf32> to vector<2x32xf32>
    %21 = vector.extract_strided_slice %19 {offsets = [0, 32], sizes = [2, 32], strides = [1, 1]} : vector<2x128xf32> to vector<2x32xf32>
    %22 = vector.extract_strided_slice %19 {offsets = [0, 96], sizes = [2, 32], strides = [1, 1]} : vector<2x128xf32> to vector<2x32xf32>
    %23 = vector.extract_strided_slice %14 {offsets = [0, 64], sizes = [2, 32], strides = [1, 1]} : vector<2x128xf32> to vector<2x32xf32>
    %24 = math.tanh %23 : vector<2x32xf32>
    %25 = arith.mulf %21, %10 : vector<2x32xf32>
    %26 = arith.mulf %20, %24 : vector<2x32xf32>
    %27 = arith.addf %25, %26 : vector<2x32xf32>
    %28 = math.tanh %27 : vector<2x32xf32>
    %29 = arith.mulf %22, %28 : vector<2x32xf32>
    %30 = vector.extract_strided_slice %7 {offsets = [0, 1, 0], sizes = [2, 1, 128], strides = [1, 1, 1]} : vector<2x8x128xf32> to vector<2x1x128xf32>
    %31 = vector.shape_cast %30 : vector<2x1x128xf32> to vector<2x128xf32>
    %cst_14 = arith.constant dense<0.000000e+00> : vector<2x128xf32>
    %32 = tpu.matmul %29, %8, %cst_14 {dimension_numbers = #tpu.dot_dimension_numbers<[1], [0], [0], [1], [0, 0, 1, 1], [], []>} : vector<2x32xf32>, vector<32x128xf32>, vector<2x128xf32> -> vector<2x128xf32>
    %33 = arith.addf %31, %32 : vector<2x128xf32>
    %34 = arith.negf %33 : vector<2x128xf32>
    %35 = math.exp %34 : vector<2x128xf32>
    %cst_15 = arith.constant 1.000000e+00 : f32
    %36 = vector.broadcast %cst_15 : f32 to vector<2x128xf32>
    %37 = arith.addf %36, %35 : vector<2x128xf32>
    %38 = arith.divf %36, %37 : vector<2x128xf32>
    %39 = vector.extract_strided_slice %38 {offsets = [0, 0], sizes = [2, 32], strides = [1, 1]} : vector<2x128xf32> to vector<2x32xf32>
    %40 = vector.extract_strided_slice %38 {offsets = [0, 32], sizes = [2, 32], strides = [1, 1]} : vector<2x128xf32> to vector<2x32xf32>
    %41 = vector.extract_strided_slice %38 {offsets = [0, 96], sizes = [2, 32], strides = [1, 1]} : vector<2x128xf32> to vector<2x32xf32>
    %42 = vector.extract_strided_slice %33 {offsets = [0, 64], sizes = [2, 32], strides = [1, 1]} : vector<2x128xf32> to vector<2x32xf32>
    %43 = math.tanh %42 : vector<2x32xf32>
    %44 = arith.mulf %40, %27 : vector<2x32xf32>
    %45 = arith.mulf %39, %43 : vector<2x32xf32>
    %46 = arith.addf %44, %45 : vector<2x32xf32>
    %47 = math.tanh %46 : vector<2x32xf32>
    %48 = arith.mulf %41, %47 : vector<2x32xf32>
    %49 = vector.extract_strided_slice %7 {offsets = [0, 2, 0], sizes = [2, 1, 128], strides = [1, 1, 1]} : vector<2x8x128xf32> to vector<2x1x128xf32>
    %50 = vector.shape_cast %49 : vector<2x1x128xf32> to vector<2x128xf32>
    %cst_16 = arith.constant dense<0.000000e+00> : vector<2x128xf32>
    %51 = tpu.matmul %48, %8, %cst_16 {dimension_numbers = #tpu.dot_dimension_numbers<[1], [0], [0], [1], [0, 0, 1, 1], [], []>} : vector<2x32xf32>, vector<32x128xf32>, vector<2x128xf32> -> vector<2x128xf32>
    %52 = arith.addf %50, %51 : vector<2x128xf32>
    %53 = arith.negf %52 : vector<2x128xf32>
    %54 = math.exp %53 : vector<2x128xf32>
    %cst_17 = arith.constant 1.000000e+00 : f32
    %55 = vector.broadcast %cst_17 : f32 to vector<2x128xf32>
    %56 = arith.addf %55, %54 : vector<2x128xf32>
    %57 = arith.divf %55, %56 : vector<2x128xf32>
    %58 = vector.extract_strided_slice %57 {offsets = [0, 0], sizes = [2, 32], strides = [1, 1]} : vector<2x128xf32> to vector<2x32xf32>
    %59 = vector.extract_strided_slice %57 {offsets = [0, 32], sizes = [2, 32], strides = [1, 1]} : vector<2x128xf32> to vector<2x32xf32>
    %60 = vector.extract_strided_slice %57 {offsets = [0, 96], sizes = [2, 32], strides = [1, 1]} : vector<2x128xf32> to vector<2x32xf32>
    %61 = vector.extract_strided_slice %52 {offsets = [0, 64], sizes = [2, 32], strides = [1, 1]} : vector<2x128xf32> to vector<2x32xf32>
    %62 = math.tanh %61 : vector<2x32xf32>
    %63 = arith.mulf %59, %46 : vector<2x32xf32>
    %64 = arith.mulf %58, %62 : vector<2x32xf32>
    %65 = arith.addf %63, %64 : vector<2x32xf32>
    %66 = math.tanh %65 : vector<2x32xf32>
    %67 = arith.mulf %60, %66 : vector<2x32xf32>
    %68 = vector.extract_strided_slice %7 {offsets = [0, 3, 0], sizes = [2, 1, 128], strides = [1, 1, 1]} : vector<2x8x128xf32> to vector<2x1x128xf32>
    %69 = vector.shape_cast %68 : vector<2x1x128xf32> to vector<2x128xf32>
    %cst_18 = arith.constant dense<0.000000e+00> : vector<2x128xf32>
    %70 = tpu.matmul %67, %8, %cst_18 {dimension_numbers = #tpu.dot_dimension_numbers<[1], [0], [0], [1], [0, 0, 1, 1], [], []>} : vector<2x32xf32>, vector<32x128xf32>, vector<2x128xf32> -> vector<2x128xf32>
    %71 = arith.addf %69, %70 : vector<2x128xf32>
    %72 = arith.negf %71 : vector<2x128xf32>
    %73 = math.exp %72 : vector<2x128xf32>
    %cst_19 = arith.constant 1.000000e+00 : f32
    %74 = vector.broadcast %cst_19 : f32 to vector<2x128xf32>
    %75 = arith.addf %74, %73 : vector<2x128xf32>
    %76 = arith.divf %74, %75 : vector<2x128xf32>
    %77 = vector.extract_strided_slice %76 {offsets = [0, 0], sizes = [2, 32], strides = [1, 1]} : vector<2x128xf32> to vector<2x32xf32>
    %78 = vector.extract_strided_slice %76 {offsets = [0, 32], sizes = [2, 32], strides = [1, 1]} : vector<2x128xf32> to vector<2x32xf32>
    %79 = vector.extract_strided_slice %76 {offsets = [0, 96], sizes = [2, 32], strides = [1, 1]} : vector<2x128xf32> to vector<2x32xf32>
    %80 = vector.extract_strided_slice %71 {offsets = [0, 64], sizes = [2, 32], strides = [1, 1]} : vector<2x128xf32> to vector<2x32xf32>
    %81 = math.tanh %80 : vector<2x32xf32>
    %82 = arith.mulf %78, %65 : vector<2x32xf32>
    %83 = arith.mulf %77, %81 : vector<2x32xf32>
    %84 = arith.addf %82, %83 : vector<2x32xf32>
    %85 = math.tanh %84 : vector<2x32xf32>
    %86 = arith.mulf %79, %85 : vector<2x32xf32>
    %87 = vector.extract_strided_slice %7 {offsets = [0, 4, 0], sizes = [2, 1, 128], strides = [1, 1, 1]} : vector<2x8x128xf32> to vector<2x1x128xf32>
    %88 = vector.shape_cast %87 : vector<2x1x128xf32> to vector<2x128xf32>
    %cst_20 = arith.constant dense<0.000000e+00> : vector<2x128xf32>
    %89 = tpu.matmul %86, %8, %cst_20 {dimension_numbers = #tpu.dot_dimension_numbers<[1], [0], [0], [1], [0, 0, 1, 1], [], []>} : vector<2x32xf32>, vector<32x128xf32>, vector<2x128xf32> -> vector<2x128xf32>
    %90 = arith.addf %88, %89 : vector<2x128xf32>
    %91 = arith.negf %90 : vector<2x128xf32>
    %92 = math.exp %91 : vector<2x128xf32>
    %cst_21 = arith.constant 1.000000e+00 : f32
    %93 = vector.broadcast %cst_21 : f32 to vector<2x128xf32>
    %94 = arith.addf %93, %92 : vector<2x128xf32>
    %95 = arith.divf %93, %94 : vector<2x128xf32>
    %96 = vector.extract_strided_slice %95 {offsets = [0, 0], sizes = [2, 32], strides = [1, 1]} : vector<2x128xf32> to vector<2x32xf32>
    %97 = vector.extract_strided_slice %95 {offsets = [0, 32], sizes = [2, 32], strides = [1, 1]} : vector<2x128xf32> to vector<2x32xf32>
    %98 = vector.extract_strided_slice %95 {offsets = [0, 96], sizes = [2, 32], strides = [1, 1]} : vector<2x128xf32> to vector<2x32xf32>
    %99 = vector.extract_strided_slice %90 {offsets = [0, 64], sizes = [2, 32], strides = [1, 1]} : vector<2x128xf32> to vector<2x32xf32>
    %100 = math.tanh %99 : vector<2x32xf32>
    %101 = arith.mulf %97, %84 : vector<2x32xf32>
    %102 = arith.mulf %96, %100 : vector<2x32xf32>
    %103 = arith.addf %101, %102 : vector<2x32xf32>
    %104 = math.tanh %103 : vector<2x32xf32>
    %105 = arith.mulf %98, %104 : vector<2x32xf32>
    %106 = vector.extract_strided_slice %7 {offsets = [0, 5, 0], sizes = [2, 1, 128], strides = [1, 1, 1]} : vector<2x8x128xf32> to vector<2x1x128xf32>
    %107 = vector.shape_cast %106 : vector<2x1x128xf32> to vector<2x128xf32>
    %cst_22 = arith.constant dense<0.000000e+00> : vector<2x128xf32>
    %108 = tpu.matmul %105, %8, %cst_22 {dimension_numbers = #tpu.dot_dimension_numbers<[1], [0], [0], [1], [0, 0, 1, 1], [], []>} : vector<2x32xf32>, vector<32x128xf32>, vector<2x128xf32> -> vector<2x128xf32>
    %109 = arith.addf %107, %108 : vector<2x128xf32>
    %110 = arith.negf %109 : vector<2x128xf32>
    %111 = math.exp %110 : vector<2x128xf32>
    %cst_23 = arith.constant 1.000000e+00 : f32
    %112 = vector.broadcast %cst_23 : f32 to vector<2x128xf32>
    %113 = arith.addf %112, %111 : vector<2x128xf32>
    %114 = arith.divf %112, %113 : vector<2x128xf32>
    %115 = vector.extract_strided_slice %114 {offsets = [0, 0], sizes = [2, 32], strides = [1, 1]} : vector<2x128xf32> to vector<2x32xf32>
    %116 = vector.extract_strided_slice %114 {offsets = [0, 32], sizes = [2, 32], strides = [1, 1]} : vector<2x128xf32> to vector<2x32xf32>
    %117 = vector.extract_strided_slice %114 {offsets = [0, 96], sizes = [2, 32], strides = [1, 1]} : vector<2x128xf32> to vector<2x32xf32>
    %118 = vector.extract_strided_slice %109 {offsets = [0, 64], sizes = [2, 32], strides = [1, 1]} : vector<2x128xf32> to vector<2x32xf32>
    %119 = math.tanh %118 : vector<2x32xf32>
    %120 = arith.mulf %116, %103 : vector<2x32xf32>
    %121 = arith.mulf %115, %119 : vector<2x32xf32>
    %122 = arith.addf %120, %121 : vector<2x32xf32>
    %123 = math.tanh %122 : vector<2x32xf32>
    %124 = arith.mulf %117, %123 : vector<2x32xf32>
    %125 = vector.extract_strided_slice %7 {offsets = [0, 6, 0], sizes = [2, 1, 128], strides = [1, 1, 1]} : vector<2x8x128xf32> to vector<2x1x128xf32>
    %126 = vector.shape_cast %125 : vector<2x1x128xf32> to vector<2x128xf32>
    %cst_24 = arith.constant dense<0.000000e+00> : vector<2x128xf32>
    %127 = tpu.matmul %124, %8, %cst_24 {dimension_numbers = #tpu.dot_dimension_numbers<[1], [0], [0], [1], [0, 0, 1, 1], [], []>} : vector<2x32xf32>, vector<32x128xf32>, vector<2x128xf32> -> vector<2x128xf32>
    %128 = arith.addf %126, %127 : vector<2x128xf32>
    %129 = arith.negf %128 : vector<2x128xf32>
    %130 = math.exp %129 : vector<2x128xf32>
    %cst_25 = arith.constant 1.000000e+00 : f32
    %131 = vector.broadcast %cst_25 : f32 to vector<2x128xf32>
    %132 = arith.addf %131, %130 : vector<2x128xf32>
    %133 = arith.divf %131, %132 : vector<2x128xf32>
    %134 = vector.extract_strided_slice %133 {offsets = [0, 0], sizes = [2, 32], strides = [1, 1]} : vector<2x128xf32> to vector<2x32xf32>
    %135 = vector.extract_strided_slice %133 {offsets = [0, 32], sizes = [2, 32], strides = [1, 1]} : vector<2x128xf32> to vector<2x32xf32>
    %136 = vector.extract_strided_slice %133 {offsets = [0, 96], sizes = [2, 32], strides = [1, 1]} : vector<2x128xf32> to vector<2x32xf32>
    %137 = vector.extract_strided_slice %128 {offsets = [0, 64], sizes = [2, 32], strides = [1, 1]} : vector<2x128xf32> to vector<2x32xf32>
    %138 = math.tanh %137 : vector<2x32xf32>
    %139 = arith.mulf %135, %122 : vector<2x32xf32>
    %140 = arith.mulf %134, %138 : vector<2x32xf32>
    %141 = arith.addf %139, %140 : vector<2x32xf32>
    %142 = math.tanh %141 : vector<2x32xf32>
    %143 = arith.mulf %136, %142 : vector<2x32xf32>
    %144 = vector.extract_strided_slice %7 {offsets = [0, 7, 0], sizes = [2, 1, 128], strides = [1, 1, 1]} : vector<2x8x128xf32> to vector<2x1x128xf32>
    %145 = vector.shape_cast %144 : vector<2x1x128xf32> to vector<2x128xf32>
    %cst_26 = arith.constant dense<0.000000e+00> : vector<2x128xf32>
    %146 = tpu.matmul %143, %8, %cst_26 {dimension_numbers = #tpu.dot_dimension_numbers<[1], [0], [0], [1], [0, 0, 1, 1], [], []>} : vector<2x32xf32>, vector<32x128xf32>, vector<2x128xf32> -> vector<2x128xf32>
    %147 = arith.addf %145, %146 : vector<2x128xf32>
    %148 = arith.negf %147 : vector<2x128xf32>
    %149 = math.exp %148 : vector<2x128xf32>
    %cst_27 = arith.constant 1.000000e+00 : f32
    %150 = vector.broadcast %cst_27 : f32 to vector<2x128xf32>
    %151 = arith.addf %150, %149 : vector<2x128xf32>
    %152 = arith.divf %150, %151 : vector<2x128xf32>
    %153 = vector.extract_strided_slice %152 {offsets = [0, 0], sizes = [2, 32], strides = [1, 1]} : vector<2x128xf32> to vector<2x32xf32>
    %154 = vector.extract_strided_slice %152 {offsets = [0, 32], sizes = [2, 32], strides = [1, 1]} : vector<2x128xf32> to vector<2x32xf32>
    %155 = vector.extract_strided_slice %152 {offsets = [0, 96], sizes = [2, 32], strides = [1, 1]} : vector<2x128xf32> to vector<2x32xf32>
    %156 = vector.extract_strided_slice %147 {offsets = [0, 64], sizes = [2, 32], strides = [1, 1]} : vector<2x128xf32> to vector<2x32xf32>
    %157 = math.tanh %156 : vector<2x32xf32>
    %158 = arith.mulf %154, %141 : vector<2x32xf32>
    %159 = arith.mulf %153, %157 : vector<2x32xf32>
    %160 = arith.addf %158, %159 : vector<2x32xf32>
    %161 = math.tanh %160 : vector<2x32xf32>
    %162 = arith.mulf %155, %161 : vector<2x32xf32>
    %163 = vector.shape_cast %29 : vector<2x32xf32> to vector<2x1x32xf32>
    %164 = vector.shape_cast %48 : vector<2x32xf32> to vector<2x1x32xf32>
    %165 = vector.shape_cast %67 : vector<2x32xf32> to vector<2x1x32xf32>
    %166 = vector.shape_cast %86 : vector<2x32xf32> to vector<2x1x32xf32>
    %167 = vector.shape_cast %105 : vector<2x32xf32> to vector<2x1x32xf32>
    %168 = vector.shape_cast %124 : vector<2x32xf32> to vector<2x1x32xf32>
    %169 = vector.shape_cast %143 : vector<2x32xf32> to vector<2x1x32xf32>
    %170 = vector.shape_cast %162 : vector<2x32xf32> to vector<2x1x32xf32>
    %171 = tpu.concatenate %163, %164, %165, %166, %167, %168, %169, %170 in 1 : vector<2x1x32xf32>, vector<2x1x32xf32>, vector<2x1x32xf32>, vector<2x1x32xf32>, vector<2x1x32xf32>, vector<2x1x32xf32>, vector<2x1x32xf32>, vector<2x1x32xf32> -> vector<2x8x32xf32>
    %172 = vector.shape_cast %171 : vector<2x8x32xf32> to vector<16x32xf32>
    %c0_28 = arith.constant 0 : index
    %c0_29 = arith.constant 0 : index
    %173 = vector.load %arg6[%c0_28, %c0_29] : memref<32x1xf32, #tpu.memory_space<vmem>>, vector<32x1xf32>
    %cst_30 = arith.constant dense<0.000000e+00> : vector<16x1xf32>
    %174 = tpu.matmul %172, %173, %cst_30 {dimension_numbers = #tpu.dot_dimension_numbers<[1], [0], [0], [1], [0, 0, 1, 1], [], []>} : vector<16x32xf32>, vector<32x1xf32>, vector<16x1xf32> -> vector<16x1xf32>
    %c0_31 = arith.constant 0 : index
    %c0_32 = arith.constant 0 : index
    %175 = vector.load %arg7[%c0_31, %c0_32] : memref<1x1xf32, #tpu.memory_space<vmem>>, vector<1x1xf32>
    %176 = vector.broadcast %175 : vector<1x1xf32> to vector<16x1xf32>
    %177 = arith.addf %174, %176 : vector<16x1xf32>
    %178 = vector.shape_cast %177 : vector<16x1xf32> to vector<2x8x1xf32>
    %c0_33 = arith.constant 0 : index
    %c0_34 = arith.constant 0 : index
    %c0_35 = arith.constant 0 : index
    %179 = vector.load %arg8[%c0_33, %c0_34, %c0_35] : memref<2x8x1xf32, #tpu.memory_space<vmem>>, vector<2x8x1xf32>
    tpu.vector_store %arg8[%c0_33, %c0_34, %c0_35], %178 {strides = array<i32>} : memref<2x8x1xf32, #tpu.memory_space<vmem>>, vector<2x8x1xf32>,
    %c0_36 = arith.constant 0 : index
    %c0_37 = arith.constant 0 : index
    %180 = vector.load %arg9[%c0_36, %c0_37] : memref<2x32xf32, #tpu.memory_space<vmem>>, vector<2x32xf32>
    tpu.vector_store %arg9[%c0_36, %c0_37], %162 {strides = array<i32>} : memref<2x32xf32, #tpu.memory_space<vmem>>, vector<2x32xf32>,
    %c0_38 = arith.constant 0 : index
    %c0_39 = arith.constant 0 : index
    %181 = vector.load %arg10[%c0_38, %c0_39] : memref<2x32xf32, #tpu.memory_space<vmem>>, vector<2x32xf32>
    tpu.vector_store %arg10[%c0_38, %c0_39], %160 {strides = array<i32>} : memref<2x32xf32, #tpu.memory_space<vmem>>, vector<2x32xf32>,
    return
  }
}

</mosaic_0001>

<llo_original>
// kernel: value_network_forward.1
$region0: #{value_network_forward.1}
  #allocation0 [shape = 'u32[]', space=smem, size = 0x4, offset = 0x4, fixed_abs, tag = 'smem constant byte address 0x4 - core index']
  #allocation1 [shape = 'u32[144,128]{1,0:T(1,128)}', space=vmem, size = 0x12000, scoped, tag = 'internal scratch']
  #allocation2 [shape = 'f32[1,1]{1,0:T(1,128)S(1)}', space=vmem, size = 0x200, scoped, tag = 'scoped memory for value_network_forward.1']
  %s0 = inlined_call_operand.vmem [shape: f32[2,8,16], index: 0, kind: input, shape index: {}]
  %s1 = inlined_call_operand.vmem [shape: f32[2,32], index: 1, kind: input, shape index: {}]
  %s2 = inlined_call_operand.vmem [shape: f32[2,32], index: 2, kind: input, shape index: {}]
  %s3 = inlined_call_operand.hbm [shape: f32[16,128], index: 3, kind: input, shape index: {}]
  %s4 = inlined_call_operand.vmem [shape: f32[32,128], index: 4, kind: input, shape index: {}]
  %s5 = inlined_call_operand.vmem [shape: f32[1,128], index: 5, kind: input, shape index: {}]
  %s6 = inlined_call_operand.vmem [shape: f32[32,1], index: 6, kind: input, shape index: {}]
  %s7 = inlined_call_operand.<no memory space> [shape: f32[1,1], index: 7, kind: input, shape index: {}]
  %s8 = inlined_call_operand.vmem [shape: f32[2,8,1], index: 8, kind: output, shape index: {0}]
  %s9 = inlined_call_operand.hbm [shape: f32[2,32], index: 9, kind: output, shape index: {1}]
  %s10 = inlined_call_operand.hbm [shape: f32[2,32], index: 10, kind: output, shape index: {2}]
  %11 = xla_tuple %s8, %s9, %s10
  %s12 = sld [smem:[#allocation0]]
  $region62: #{value_network_forward.1} parent=0
    _
  %s14 = ssub.s32 1, %s12
  %s15 = scalar_select 0, %s14, %s12
  %v16 = vstv %s7
  %17 = vst [vmem:[#allocation2] sm:$0x1] %v16
  $region1: #{value_network_forward.1} parent=0
    #allocation3 [shape = 'u8[8192]{0}', space=vmem, size = 0x2000, scoped, tag = 'input window, operand 3, single buffered']
    #allocation4 [shape = 's32[1]{0}', space=sflag, size = 0x4, scoped, tag = 'scoped memory for value_network_forward.1']
    #allocation5 [shape = 's32[1]{0}', space=sflag, size = 0x4, scoped, tag = 'scoped memory for value_network_forward.1']
    #allocation6 [shape = 'u8[1024]{0}', space=vmem, size = 0x400, scoped, tag = 'output window, operand 1, single buffered']
    #allocation7 [shape = 'u8[1024]{0}', space=vmem, size = 0x400, scoped, tag = 'output window, operand 2, single buffered']
    #allocation8 [shape = 's32[1]{0}', space=sflag, size = 0x4, scoped, tag = 'scoped memory for value_network_forward.1']
    %18 = vsyncpa [#allocation4], 0
    %19 = vsyncpa [#allocation5], 0
    %20 = vsyncpa [#allocation8], 0
    // Predicated region
    $region2: #{value_network_forward.1} parent=1 // pred_check
      _
    $region3: #{value_network_forward.1} parent=1 // pred_check_branch
      %22 = sbr.rel (0) target = $region5
    $region4: #{value_network_forward.1} parent=1 // pred_region
      _
    $region5: #{value_network_forward.1} parent=1 // pred_fallthru
      _
    // Predicated region
    $region6: #{value_network_forward.1} parent=1 // pred_check
      _
    $region7: #{value_network_forward.1} parent=1 // pred_check_branch
      %24 = sbr.rel (0) target = $region9
    $region8: #{value_network_forward.1} parent=1 // pred_region
      _
    $region9: #{value_network_forward.1} parent=1 // pred_fallthru
      _
    // Predicated region
    $region10: #{value_network_forward.1} parent=1 // pred_check
      _
    $region11: #{value_network_forward.1} parent=1 // pred_check_branch
      %26 = sbr.rel (0) target = $region13
    $region12: #{value_network_forward.1} parent=1 // pred_region
      _
    $region13: #{value_network_forward.1} parent=1 // pred_fallthru
      _
    // Predicated region
    $region14: #{value_network_forward.1} parent=1 // pred_check
      _
    $region15: #{value_network_forward.1} parent=1 // pred_check_branch
      %28 = sbr.rel (0) target = $region17
    $region16: #{value_network_forward.1} parent=1 // pred_region
      %s30 = ssub.s32 256, 256
      %31 = vsyncadd [#allocation4], %s30
      %s32 = sshll.u32 [#allocation3], 4
      %s33 = int_to_ptr.vmem [resolvable:$true] %s32
      %38 = dma.hbm_to_vmem [thread:$0]  %s3, 256, %s33, [#allocation4], 128, 128, 8
    $region17: #{value_network_forward.1} parent=1 // pred_fallthru
      _
    // Predicated region
    $region18: #{value_network_forward.1} parent=1 // pred_check
      _
    $region19: #{value_network_forward.1} parent=1 // pred_check_branch
      %40 = sbr.rel (0) target = $region21
    $region20: #{value_network_forward.1} parent=1 // pred_region
      _
    $region21: #{value_network_forward.1} parent=1 // pred_fallthru
      _
    // Predicated region
    $region22: #{value_network_forward.1} parent=1 // pred_check
      _
    $region23: #{value_network_forward.1} parent=1 // pred_check_branch
      %42 = sbr.rel (0) target = $region25
    $region24: #{value_network_forward.1} parent=1 // pred_region
      _
    $region25: #{value_network_forward.1} parent=1 // pred_fallthru
      _
    // Predicated region
    $region26: #{value_network_forward.1} parent=1 // pred_check
      _
    $region27: #{value_network_forward.1} parent=1 // pred_check_branch
      %44 = sbr.rel (0) target = $region29
    $region28: #{value_network_forward.1} parent=1 // pred_region
      _
    $region29: #{value_network_forward.1} parent=1 // pred_fallthru
      _
    // Predicated region
    $region30: #{value_network_forward.1} parent=1 // pred_check
      _
    $region31: #{value_network_forward.1} parent=1 // pred_check_branch
      %46 = sbr.rel (0) target = $region33
    $region32: #{value_network_forward.1} parent=1 // pred_region
      _
    $region33: #{value_network_forward.1} parent=1 // pred_fallthru
      _
    // Predicated region
    $region34: #{value_network_forward.1} parent=1 // pred_check
      _
    $region35: #{value_network_forward.1} parent=1 // pred_check_branch
      %48 = sbr.rel (0) target = $region37
    $region36: #{value_network_forward.1} parent=1 // pred_region
      %49 = dma.done [#allocation4], 256
    $region37: #{value_network_forward.1} parent=1 // pred_fallthru
      _
    %v50 = vld [vmem:[%s0] sm:$0xff]
    %v51 = vld [vmem:[%s0 + $0x8] sm:$0xff]
    %v52 = vld [vmem:[#allocation3] sm:$0xff]
    %v53 = vld [vmem:[#allocation3 + $0x8] sm:$0xff]
    %v54 = vld [vmem:[%s5] sm:$0x1]
    %v56 = vlaneseq
    %v57 = vshrl.u32 %v56, 7
    %v58 = vsub.s32 0, %v57
    %v59 = vrot.slane %v54, %v58
    %vm61 = vcmask 130048
    %v63 = vsel %vm61, %v50, 0
    %v66 = vsel %vm61, %v51, 0
    %68 = vmatprep.subr.mxu0 0.0
    %69 = vmatpush1.msra.mxu0 %v52
    %70 = vmatprep.subr.mxu0 0.0
    %71 = vmatpush1.msra.mxu0 %v53
    %72 = vmatprep.subr.mxu0 0.0
    %73 = vmatpush1.msra.mxu0 0.0
    %74 = vmatprep.subr.mxu0 0.0
    %75 = vmatpush1.msra.mxu0 0.0
    %76 = vmatprep.subr.mxu0 0.0
    %77 = vmatpush1.msra.mxu0 0.0
    %78 = vmatprep.subr.mxu0 0.0
    %79 = vmatpush1.msra.mxu0 0.0
    %80 = vmatprep.subr.mxu0 0.0
    %81 = vmatpush1.msra.mxu0 0.0
    %82 = vmatprep.subr.mxu0 0.0
    %83 = vmatpush1.msra.mxu0 0.0
    %84 = vmatprep.subr.mxu0 0.0
    %85 = vmatpush1.msra.mxu0 0.0
    %86 = vmatprep.subr.mxu0 0.0
    %87 = vmatpush1.msra.mxu0 0.0
    %88 = vmatprep.subr.mxu0 0.0
    %89 = vmatpush1.msra.mxu0 0.0
    %90 = vmatprep.subr.mxu0 0.0
    %91 = vmatpush1.msra.mxu0 0.0
    %92 = vmatprep.subr.mxu0 0.0
    %93 = vmatpush1.msra.mxu0 0.0
    %94 = vmatprep.subr.mxu0 0.0
    %95 = vmatpush1.msra.mxu0 0.0
    %96 = vmatprep.subr.mxu0 0.0
    %97 = vmatpush1.msra.mxu0 0.0
    %98 = vmatprep.subr.mxu0 0.0
    %99 = vmatpush1.msra.mxu0 0.0
    %100 = vmatprep.subr.mxu0 0.0
    %101 = vmatpush1.msra.mxu0 0.0
    %102 = vmatprep.subr.mxu0 0.0
    %103 = vmatpush1.msra.mxu0 0.0
    %104 = vmatprep.subr.mxu0 0.0
    %105 = vmatpush1.msra.mxu0 0.0
    %106 = vmatprep.subr.mxu0 0.0
    %107 = vmatpush1.msra.mxu0 0.0
    %108 = vmatprep.subr.mxu0 0.0
    %109 = vmatpush1.msra.mxu0 0.0
    %110 = vmatprep.subr.mxu0 0.0
    %111 = vmatpush1.msra.mxu0 0.0
    %112 = vmatprep.subr.mxu0 0.0
    %113 = vmatpush1.msra.mxu0 0.0
    %114 = vmatprep.subr.mxu0 0.0
    %115 = vmatpush1.msra.mxu0 0.0
    %116 = vmatprep.subr.mxu0 0.0
    %117 = vmatpush1.msra.mxu0 0.0
    %118 = vmatprep.subr.mxu0 0.0
    %119 = vmatpush1.msra.mxu0 0.0
    %120 = vmatprep.subr.mxu0 0.0
    %121 = vmatpush1.msra.mxu0 0.0
    %122 = vmatprep.subr.mxu0 0.0
    %123 = vmatpush1.msra.mxu0 0.0
    %124 = vmatprep.subr.mxu0 0.0
    %125 = vmatpush1.msra.mxu0 0.0
    %126 = vmatprep.subr.mxu0 0.0
    %127 = vmatpush1.msra.mxu0 0.0
    %128 = vmatprep.subr.mxu0 0.0
    %129 = vmatpush1.msra.mxu0 0.0
    %130 = vmatprep.subr.mxu0 0.0
    %131 = vmatpush1.msra.mxu0 0.0
    %132 = vmatprep.mubr.f32.mxu0 0.0
    %133 = vmatmul.mubr.f32.gmra.mrb[0].mxu0 %v63
    %v134 = vpop.f32.mrb[0].mxu0
    %v135 = vadd.f32 %v59, %v134
    %v136 = vpop.f32.mrb[0].mxu0
    %137 = vmatprep.mubr.f32.mxu0 0.0
    %138 = vmatmul.mubr.f32.gmra.mrb[0].mxu0 %v66
    %v139 = vpop.f32.mrb[0].mxu0
    %v140 = vadd.f32 %v59, %v139
    %v141 = vpop.f32.mrb[0].mxu0
    %142 = vdwg.mxu0
    %v143 = vld [vmem:[%s4] sm:$0xff]
    %v144 = vld [vmem:[%s4 + $0x8] sm:$0xff]
    %v145 = vld [vmem:[%s4 + $0x10] sm:$0xff]
    %v146 = vld [vmem:[%s4 + $0x18] sm:$0xff]
    %v147 = vld [vmem:[%s1] sm:$0x3]
    %v148 = vld [vmem:[%s2] sm:$0x3]
    %vm149 = vcmask 261120
    %v151 = vsel %vm149, %v147, 0
    %153 = vmatprep.subr.mxu0 0.0
    %154 = vmatpush1.msra.mxu0 %v143
    %155 = vmatprep.subr.mxu0 0.0
    %156 = vmatpush1.msra.mxu0 %v144
    %157 = vmatprep.subr.mxu0 0.0
    %158 = vmatpush1.msra.mxu0 %v145
    %159 = vmatprep.subr.mxu0 0.0
    %160 = vmatpush1.msra.mxu0 %v146
    %161 = vmatprep.subr.mxu0 0.0
    %162 = vmatpush1.msra.mxu0 0.0
    %163 = vmatprep.subr.mxu0 0.0
    %164 = vmatpush1.msra.mxu0 0.0
    %165 = vmatprep.subr.mxu0 0.0
    %166 = vmatpush1.msra.mxu0 0.0
    %167 = vmatprep.subr.mxu0 0.0
    %168 = vmatpush1.msra.mxu0 0.0
    %169 = vmatprep.subr.mxu0 0.0
    %170 = vmatpush1.msra.mxu0 0.0
    %171 = vmatprep.subr.mxu0 0.0
    %172 = vmatpush1.msra.mxu0 0.0
    %173 = vmatprep.subr.mxu0 0.0
    %174 = vmatpush1.msra.mxu0 0.0
    %175 = vmatprep.subr.mxu0 0.0
    %176 = vmatpush1.msra.mxu0 0.0
    %177 = vmatprep.subr.mxu0 0.0
    %178 = vmatpush1.msra.mxu0 0.0
    %179 = vmatprep.subr.mxu0 0.0
    %180 = vmatpush1.msra.mxu0 0.0
    %181 = vmatprep.subr.mxu0 0.0
    %182 = vmatpush1.msra.mxu0 0.0
    %183 = vmatprep.subr.mxu0 0.0
    %184 = vmatpush1.msra.mxu0 0.0
    %185 = vmatprep.subr.mxu0 0.0
    %186 = vmatpush1.msra.mxu0 0.0
    %187 = vmatprep.subr.mxu0 0.0
    %188 = vmatpush1.msra.mxu0 0.0
    %189 = vmatprep.subr.mxu0 0.0
    %190 = vmatpush1.msra.mxu0 0.0
    %191 = vmatprep.subr.mxu0 0.0
    %192 = vmatpush1.msra.mxu0 0.0
    %193 = vmatprep.subr.mxu0 0.0
    %194 = vmatpush1.msra.mxu0 0.0
    %195 = vmatprep.subr.mxu0 0.0
    %196 = vmatpush1.msra.mxu0 0.0
    %197 = vmatprep.subr.mxu0 0.0
    %198 = vmatpush1.msra.mxu0 0.0
    %199 = vmatprep.subr.mxu0 0.0
    %200 = vmatpush1.msra.mxu0 0.0
    %201 = vmatprep.subr.mxu0 0.0
    %202 = vmatpush1.msra.mxu0 0.0
    %203 = vmatprep.subr.mxu0 0.0
    %204 = vmatpush1.msra.mxu0 0.0
    %205 = vmatprep.subr.mxu0 0.0
    %206 = vmatpush1.msra.mxu0 0.0
    %207 = vmatprep.subr.mxu0 0.0
    %208 = vmatpush1.msra.mxu0 0.0
    %209 = vmatprep.subr.mxu0 0.0
    %210 = vmatpush1.msra.mxu0 0.0
    %211 = vmatprep.subr.mxu0 0.0
    %212 = vmatpush1.msra.mxu0 0.0
    %213 = vmatprep.subr.mxu0 0.0
    %214 = vmatpush1.msra.mxu0 0.0
    %215 = vmatprep.subr.mxu0 0.0
    %216 = vmatpush1.msra.mxu0 0.0
    %217 = vmatprep.mubr.f32.mxu0 0.0
    %218 = vmatmul.mubr.f32.gmra.mrb[0].mxu0 %v151
    %v219 = vpop.f32.mrb[0].mxu0
    %v220 = vadd.f32 0.0, %v219
    %v221 = vpop.f32.mrb[0].mxu0
    %222 = vdwg.mxu0
    %v224 = vrot.slane %v220, 1
    %v227 = vadd.f32 %v135, %v220
    %v228 = vadd.f32 %v140, %v224
    %v229 = vxor.u32 %v227, 2147483648
    %v230 = vxor.u32 %v228, 2147483648
    %v231 = vmul.f32 %v229, 1.442695
    %v232 = vpow.pop %v231
    %v233 = vmul.f32 %v230, 1.442695
    %v234 = vpow.pop %v233
    %v235 = vadd.f32 %v232, 1.0
    %v236 = vadd.f32 %v234, 1.0
    %v237 = vrcp.pop %v235
    %v238 = vmul.f32 1.0, %v237
    %v239 = vrcp.pop %v236
    %v240 = vmul.f32 1.0, %v239
    %v241 = vtanh.pop %v227
    %v242 = vtanh.pop %v228
    %v244 = vrot.slane %v148, 1
    %245 = vrot.lane.b32.xlu0 %v148, 32
    %v246 = vpop.permute.xlu0 %245
    %247 = vrot.lane.b32.xlu0 %v244, 32
    %v248 = vpop.permute.xlu0 %247
    %v251 = vmul.f32 %v238, %v246
    %v252 = vmul.f32 %v240, %v248
    %255 = vrot.lane.b32.xlu0 %v241, 64
    %v256 = vpop.permute.xlu0 %255
    %257 = vrot.lane.b32.xlu0 %v242, 64
    %v258 = vpop.permute.xlu0 %257
    %v261 = vmul.f32 %v238, %v256
    %v262 = vmul.f32 %v240, %v258
    %265 = vrot.lane.b32.xlu0 %v261, 32
    %v266 = vpop.permute.xlu0 %265
    %267 = vrot.lane.b32.xlu0 %v262, 32
    %v268 = vpop.permute.xlu0 %267
    %v271 = vadd.f32 %v251, %v266
    %v272 = vadd.f32 %v252, %v268
    %v273 = vtanh.pop %v271
    %v274 = vtanh.pop %v272
    %277 = vrot.lane.b32.xlu0 %v273, 64
    %v278 = vpop.permute.xlu0 %277
    %279 = vrot.lane.b32.xlu0 %v274, 64
    %v280 = vpop.permute.xlu0 %279
    %v283 = vmul.f32 %v238, %v278
    %v284 = vmul.f32 %v240, %v280
    %v287 = vrot.slane %v284, 7
    %vm288 = vcmask 1041409
    %v289 = vsel %vm288, %v287, %v283
    %290 = vrot.lane.b32.xlu0 %v289, 32
    %v291 = vpop.permute.xlu0 %290
    %v292 = vsel %vm149, %v291, 0
    %294 = vmatprep.subr.mxu0 0.0
    %295 = vmatpush1.msra.mxu0 %v143
    %296 = vmatprep.subr.mxu0 0.0
    %297 = vmatpush1.msra.mxu0 %v144
    %298 = vmatprep.subr.mxu0 0.0
    %299 = vmatpush1.msra.mxu0 %v145
    %300 = vmatprep.subr.mxu0 0.0
    %301 = vmatpush1.msra.mxu0 %v146
    %302 = vmatprep.subr.mxu0 0.0
    %303 = vmatpush1.msra.mxu0 0.0
    %304 = vmatprep.subr.mxu0 0.0
    %305 = vmatpush1.msra.mxu0 0.0
    %306 = vmatprep.subr.mxu0 0.0
    %307 = vmatpush1.msra.mxu0 0.0
    %308 = vmatprep.subr.mxu0 0.0
    %309 = vmatpush1.msra.mxu0 0.0
    %310 = vmatprep.subr.mxu0 0.0
    %311 = vmatpush1.msra.mxu0 0.0
    %312 = vmatprep.subr.mxu0 0.0
    %313 = vmatpush1.msra.mxu0 0.0
    %314 = vmatprep.subr.mxu0 0.0
    %315 = vmatpush1.msra.mxu0 0.0
    %316 = vmatprep.subr.mxu0 0.0
    %317 = vmatpush1.msra.mxu0 0.0
    %318 = vmatprep.subr.mxu0 0.0
    %319 = vmatpush1.msra.mxu0 0.0
    %320 = vmatprep.subr.mxu0 0.0
    %321 = vmatpush1.msra.mxu0 0.0
    %322 = vmatprep.subr.mxu0 0.0
    %323 = vmatpush1.msra.mxu0 0.0
    %324 = vmatprep.subr.mxu0 0.0
    %325 = vmatpush1.msra.mxu0 0.0
    %326 = vmatprep.subr.mxu0 0.0
    %327 = vmatpush1.msra.mxu0 0.0
    %328 = vmatprep.subr.mxu0 0.0
    %329 = vmatpush1.msra.mxu0 0.0
    %330 = vmatprep.subr.mxu0 0.0
    %331 = vmatpush1.msra.mxu0 0.0
    %332 = vmatprep.subr.mxu0 0.0
    %333 = vmatpush1.msra.mxu0 0.0
    %334 = vmatprep.subr.mxu0 0.0
    %335 = vmatpush1.msra.mxu0 0.0
    %336 = vmatprep.subr.mxu0 0.0
    %337 = vmatpush1.msra.mxu0 0.0
    %338 = vmatprep.subr.mxu0 0.0
    %339 = vmatpush1.msra.mxu0 0.0
    %340 = vmatprep.subr.mxu0 0.0
    %341 = vmatpush1.msra.mxu0 0.0
    %342 = vmatprep.subr.mxu0 0.0
    %343 = vmatpush1.msra.mxu0 0.0
    %344 = vmatprep.subr.mxu0 0.0
    %345 = vmatpush1.msra.mxu0 0.0
    %346 = vmatprep.subr.mxu0 0.0
    %347 = vmatpush1.msra.mxu0 0.0
    %348 = vmatprep.subr.mxu0 0.0
    %349 = vmatpush1.msra.mxu0 0.0
    %350 = vmatprep.subr.mxu0 0.0
    %351 = vmatpush1.msra.mxu0 0.0
    %352 = vmatprep.subr.mxu0 0.0
    %353 = vmatpush1.msra.mxu0 0.0
    %354 = vmatprep.subr.mxu0 0.0
    %355 = vmatpush1.msra.mxu0 0.0
    %356 = vmatprep.subr.mxu0 0.0
    %357 = vmatpush1.msra.mxu0 0.0
    %358 = vmatprep.mubr.f32.mxu0 0.0
    %359 = vmatmul.mubr.f32.gmra.mrb[0].mxu0 %v292
    %v360 = vpop.f32.mrb[0].mxu0
    %v361 = vadd.f32 0.0, %v360
    %v362 = vpop.f32.mrb[0].mxu0
    %363 = vdwg.mxu0
    %v365 = vrot.slane %v361, 7
    %v368 = vadd.f32 %v135, %v365
    %v369 = vadd.f32 %v140, %v361
    %v370 = vxor.u32 %v368, 2147483648
    %v371 = vxor.u32 %v369, 2147483648
    %v372 = vmul.f32 %v370, 1.442695
    %v373 = vpow.pop %v372
    %v374 = vmul.f32 %v371, 1.442695
    %v375 = vpow.pop %v374
    %v376 = vadd.f32 %v373, 1.0
    %v377 = vadd.f32 %v375, 1.0
    %v378 = vrcp.pop %v376
    %v379 = vmul.f32 1.0, %v378
    %v380 = vrcp.pop %v377
    %v381 = vmul.f32 1.0, %v380
    %v382 = vtanh.pop %v368
    %v383 = vtanh.pop %v369
    %v386 = vrot.slane %v271, 7
    %v387 = vrot.slane %v272, 7
    %v390 = vmul.f32 %v379, %v386
    %v391 = vmul.f32 %v381, %v387
    %394 = vrot.lane.b32.xlu0 %v382, 64
    %v395 = vpop.permute.xlu0 %394
    %396 = vrot.lane.b32.xlu0 %v383, 64
    %v397 = vpop.permute.xlu0 %396
    %v400 = vmul.f32 %v379, %v395
    %v401 = vmul.f32 %v381, %v397
    %404 = vrot.lane.b32.xlu0 %v400, 32
    %v405 = vpop.permute.xlu0 %404
    %406 = vrot.lane.b32.xlu0 %v401, 32
    %v407 = vpop.permute.xlu0 %406
    %v410 = vadd.f32 %v390, %v405
    %v411 = vadd.f32 %v391, %v407
    %v412 = vtanh.pop %v410
    %v413 = vtanh.pop %v411
    %416 = vrot.lane.b32.xlu0 %v412, 64
    %v417 = vpop.permute.xlu0 %416
    %418 = vrot.lane.b32.xlu0 %v413, 64
    %v419 = vpop.permute.xlu0 %418
    %v422 = vmul.f32 %v379, %v417
    %v423 = vmul.f32 %v381, %v419
    %v426 = vrot.slane %v422, 1
    %v427 = vsel %vm288, %v423, %v426
    %428 = vrot.lane.b32.xlu0 %v427, 32
    %v429 = vpop.permute.xlu0 %428
    %v430 = vsel %vm149, %v429, 0
    %432 = vmatprep.subr.mxu0 0.0
    %433 = vmatpush1.msra.mxu0 %v143
    %434 = vmatprep.subr.mxu0 0.0
    %435 = vmatpush1.msra.mxu0 %v144
    %436 = vmatprep.subr.mxu0 0.0
    %437 = vmatpush1.msra.mxu0 %v145
    %438 = vmatprep.subr.mxu0 0.0
    %439 = vmatpush1.msra.mxu0 %v146
    %440 = vmatprep.subr.mxu0 0.0
    %441 = vmatpush1.msra.mxu0 0.0
    %442 = vmatprep.subr.mxu0 0.0
    %443 = vmatpush1.msra.mxu0 0.0
    %444 = vmatprep.subr.mxu0 0.0
    %445 = vmatpush1.msra.mxu0 0.0
    %446 = vmatprep.subr.mxu0 0.0
    %447 = vmatpush1.msra.mxu0 0.0
    %448 = vmatprep.subr.mxu0 0.0
    %449 = vmatpush1.msra.mxu0 0.0
    %450 = vmatprep.subr.mxu0 0.0
    %451 = vmatpush1.msra.mxu0 0.0
    %452 = vmatprep.subr.mxu0 0.0
    %453 = vmatpush1.msra.mxu0 0.0
    %454 = vmatprep.subr.mxu0 0.0
    %455 = vmatpush1.msra.mxu0 0.0
    %456 = vmatprep.subr.mxu0 0.0
    %457 = vmatpush1.msra.mxu0 0.0
    %458 = vmatprep.subr.mxu0 0.0
    %459 = vmatpush1.msra.mxu0 0.0
    %460 = vmatprep.subr.mxu0 0.0
    %461 = vmatpush1.msra.mxu0 0.0
    %462 = vmatprep.subr.mxu0 0.0
    %463 = vmatpush1.msra.mxu0 0.0
    %464 = vmatprep.subr.mxu0 0.0
    %465 = vmatpush1.msra.mxu0 0.0
    %466 = vmatprep.subr.mxu0 0.0
    %467 = vmatpush1.msra.mxu0 0.0
    %468 = vmatprep.subr.mxu0 0.0
    %469 = vmatpush1.msra.mxu0 0.0
    %470 = vmatprep.subr.mxu0 0.0
    %471 = vmatpush1.msra.mxu0 0.0
    %472 = vmatprep.subr.mxu0 0.0
    %473 = vmatpush1.msra.mxu0 0.0
    %474 = vmatprep.subr.mxu0 0.0
    %475 = vmatpush1.msra.mxu0 0.0
    %476 = vmatprep.subr.mxu0 0.0
    %477 = vmatpush1.msra.mxu0 0.0
    %478 = vmatprep.subr.mxu0 0.0
    %479 = vmatpush1.msra.mxu0 0.0
    %480 = vmatprep.subr.mxu0 0.0
    %481 = vmatpush1.msra.mxu0 0.0
    %482 = vmatprep.subr.mxu0 0.0
    %483 = vmatpush1.msra.mxu0 0.0
    %484 = vmatprep.subr.mxu0 0.0
    %485 = vmatpush1.msra.mxu0 0.0
    %486 = vmatprep.subr.mxu0 0.0
    %487 = vmatpush1.msra.mxu0 0.0
    %488 = vmatprep.subr.mxu0 0.0
    %489 = vmatpush1.msra.mxu0 0.0
    %490 = vmatprep.subr.mxu0 0.0
    %491 = vmatpush1.msra.mxu0 0.0
    %492 = vmatprep.subr.mxu0 0.0
    %493 = vmatpush1.msra.mxu0 0.0
    %494 = vmatprep.subr.mxu0 0.0
    %495 = vmatpush1.msra.mxu0 0.0
    %496 = vmatprep.mubr.f32.mxu0 0.0
    %497 = vmatmul.mubr.f32.gmra.mrb[0].mxu0 %v430
    %v498 = vpop.f32.mrb[0].mxu0
    %v499 = vadd.f32 0.0, %v498
    %v500 = vpop.f32.mrb[0].mxu0
    %501 = vdwg.mxu0
    %v503 = vrot.slane %v499, 6
    %v504 = vrot.slane %v499, 7
    %v507 = vadd.f32 %v135, %v503
    %v508 = vadd.f32 %v140, %v504
    %v509 = vxor.u32 %v507, 2147483648
    %v510 = vxor.u32 %v508, 2147483648
    %v511 = vmul.f32 %v509, 1.442695
    %v512 = vpow.pop %v511
    %v513 = vmul.f32 %v510, 1.442695
    %v514 = vpow.pop %v513
    %v515 = vadd.f32 %v512, 1.0
    %v516 = vadd.f32 %v514, 1.0
    %v517 = vrcp.pop %v515
    %v518 = vmul.f32 1.0, %v517
    %v519 = vrcp.pop %v516
    %v520 = vmul.f32 1.0, %v519
    %v521 = vtanh.pop %v507
    %v522 = vtanh.pop %v508
    %v525 = vrot.slane %v410, 7
    %v526 = vrot.slane %v411, 7
    %v529 = vmul.f32 %v518, %v525
    %v530 = vmul.f32 %v520, %v526
    %533 = vrot.lane.b32.xlu0 %v521, 64
    %v534 = vpop.permute.xlu0 %533
    %535 = vrot.lane.b32.xlu0 %v522, 64
    %v536 = vpop.permute.xlu0 %535
    %v539 = vmul.f32 %v518, %v534
    %v540 = vmul.f32 %v520, %v536
    %543 = vrot.lane.b32.xlu0 %v539, 32
    %v544 = vpop.permute.xlu0 %543
    %545 = vrot.lane.b32.xlu0 %v540, 32
    %v546 = vpop.permute.xlu0 %545
    %v549 = vadd.f32 %v529, %v544
    %v550 = vadd.f32 %v530, %v546
    %v551 = vtanh.pop %v549
    %v552 = vtanh.pop %v550
    %555 = vrot.lane.b32.xlu0 %v551, 64
    %v556 = vpop.permute.xlu0 %555
    %557 = vrot.lane.b32.xlu0 %v552, 64
    %v558 = vpop.permute.xlu0 %557
    %v561 = vmul.f32 %v518, %v556
    %v562 = vmul.f32 %v520, %v558
    %v565 = vrot.slane %v561, 2
    %v566 = vrot.slane %v562, 1
    %v567 = vsel %vm288, %v566, %v565
    %568 = vrot.lane.b32.xlu0 %v567, 32
    %v569 = vpop.permute.xlu0 %568
    %v570 = vsel %vm149, %v569, 0
    %572 = vmatprep.subr.mxu0 0.0
    %573 = vmatpush1.msra.mxu0 %v143
    %574 = vmatprep.subr.mxu0 0.0
    %575 = vmatpush1.msra.mxu0 %v144
    %576 = vmatprep.subr.mxu0 0.0
    %577 = vmatpush1.msra.mxu0 %v145
    %578 = vmatprep.subr.mxu0 0.0
    %579 = vmatpush1.msra.mxu0 %v146
    %580 = vmatprep.subr.mxu0 0.0
    %581 = vmatpush1.msra.mxu0 0.0
    %582 = vmatprep.subr.mxu0 0.0
    %583 = vmatpush1.msra.mxu0 0.0
    %584 = vmatprep.subr.mxu0 0.0
    %585 = vmatpush1.msra.mxu0 0.0
    %586 = vmatprep.subr.mxu0 0.0
    %587 = vmatpush1.msra.mxu0 0.0
    %588 = vmatprep.subr.mxu0 0.0
    %589 = vmatpush1.msra.mxu0 0.0
    %590 = vmatprep.subr.mxu0 0.0
    %591 = vmatpush1.msra.mxu0 0.0
    %592 = vmatprep.subr.mxu0 0.0
    %593 = vmatpush1.msra.mxu0 0.0
    %594 = vmatprep.subr.mxu0 0.0
    %595 = vmatpush1.msra.mxu0 0.0
    %596 = vmatprep.subr.mxu0 0.0
    %597 = vmatpush1.msra.mxu0 0.0
    %598 = vmatprep.subr.mxu0 0.0
    %599 = vmatpush1.msra.mxu0 0.0
    %600 = vmatprep.subr.mxu0 0.0
    %601 = vmatpush1.msra.mxu0 0.0
    %602 = vmatprep.subr.mxu0 0.0
    %603 = vmatpush1.msra.mxu0 0.0
    %604 = vmatprep.subr.mxu0 0.0
    %605 = vmatpush1.msra.mxu0 0.0
    %606 = vmatprep.subr.mxu0 0.0
    %607 = vmatpush1.msra.mxu0 0.0
    %608 = vmatprep.subr.mxu0 0.0
    %609 = vmatpush1.msra.mxu0 0.0
    %610 = vmatprep.subr.mxu0 0.0
    %611 = vmatpush1.msra.mxu0 0.0
    %612 = vmatprep.subr.mxu0 0.0
    %613 = vmatpush1.msra.mxu0 0.0
    %614 = vmatprep.subr.mxu0 0.0
    %615 = vmatpush1.msra.mxu0 0.0
    %616 = vmatprep.subr.mxu0 0.0
    %617 = vmatpush1.msra.mxu0 0.0
    %618 = vmatprep.subr.mxu0 0.0
    %619 = vmatpush1.msra.mxu0 0.0
    %620 = vmatprep.subr.mxu0 0.0
    %621 = vmatpush1.msra.mxu0 0.0
    %622 = vmatprep.subr.mxu0 0.0
    %623 = vmatpush1.msra.mxu0 0.0
    %624 = vmatprep.subr.mxu0 0.0
    %625 = vmatpush1.msra.mxu0 0.0
    %626 = vmatprep.subr.mxu0 0.0
    %627 = vmatpush1.msra.mxu0 0.0
    %628 = vmatprep.subr.mxu0 0.0
    %629 = vmatpush1.msra.mxu0 0.0
    %630 = vmatprep.subr.mxu0 0.0
    %631 = vmatpush1.msra.mxu0 0.0
    %632 = vmatprep.subr.mxu0 0.0
    %633 = vmatpush1.msra.mxu0 0.0
    %634 = vmatprep.subr.mxu0 0.0
    %635 = vmatpush1.msra.mxu0 0.0
    %636 = vmatprep.mubr.f32.mxu0 0.0
    %637 = vmatmul.mubr.f32.gmra.mrb[0].mxu0 %v570
    %v638 = vpop.f32.mrb[0].mxu0
    %v639 = vadd.f32 0.0, %v638
    %v640 = vpop.f32.mrb[0].mxu0
    %641 = vdwg.mxu0
    %v643 = vrot.slane %v639, 5
    %v644 = vrot.slane %v639, 6
    %v647 = vadd.f32 %v135, %v643
    %v648 = vadd.f32 %v140, %v644
    %v649 = vxor.u32 %v647, 2147483648
    %v650 = vxor.u32 %v648, 2147483648
    %v651 = vmul.f32 %v649, 1.442695
    %v652 = vpow.pop %v651
    %v653 = vmul.f32 %v650, 1.442695
    %v654 = vpow.pop %v653
    %v655 = vadd.f32 %v652, 1.0
    %v656 = vadd.f32 %v654, 1.0
    %v657 = vrcp.pop %v655
    %v658 = vmul.f32 1.0, %v657
    %v659 = vrcp.pop %v656
    %v660 = vmul.f32 1.0, %v659
    %v661 = vtanh.pop %v647
    %v662 = vtanh.pop %v648
    %v665 = vrot.slane %v549, 7
    %v666 = vrot.slane %v550, 7
    %v669 = vmul.f32 %v658, %v665
    %v670 = vmul.f32 %v660, %v666
    %673 = vrot.lane.b32.xlu0 %v661, 64
    %v674 = vpop.permute.xlu0 %673
    %675 = vrot.lane.b32.xlu0 %v662, 64
    %v676 = vpop.permute.xlu0 %675
    %v679 = vmul.f32 %v658, %v674
    %v680 = vmul.f32 %v660, %v676
    %683 = vrot.lane.b32.xlu0 %v679, 32
    %v684 = vpop.permute.xlu0 %683
    %685 = vrot.lane.b32.xlu0 %v680, 32
    %v686 = vpop.permute.xlu0 %685
    %v689 = vadd.f32 %v669, %v684
    %v690 = vadd.f32 %v670, %v686
    %v691 = vtanh.pop %v689
    %v692 = vtanh.pop %v690
    %695 = vrot.lane.b32.xlu0 %v691, 64
    %v696 = vpop.permute.xlu0 %695
    %697 = vrot.lane.b32.xlu0 %v692, 64
    %v698 = vpop.permute.xlu0 %697
    %v701 = vmul.f32 %v658, %v696
    %v702 = vmul.f32 %v660, %v698
    %v705 = vrot.slane %v701, 3
    %v706 = vrot.slane %v702, 2
    %v707 = vsel %vm288, %v706, %v705
    %708 = vrot.lane.b32.xlu0 %v707, 32
    %v709 = vpop.permute.xlu0 %708
    %v710 = vsel %vm149, %v709, 0
    %712 = vmatprep.subr.mxu0 0.0
    %713 = vmatpush1.msra.mxu0 %v143
    %714 = vmatprep.subr.mxu0 0.0
    %715 = vmatpush1.msra.mxu0 %v144
    %716 = vmatprep.subr.mxu0 0.0
    %717 = vmatpush1.msra.mxu0 %v145
    %718 = vmatprep.subr.mxu0 0.0
    %719 = vmatpush1.msra.mxu0 %v146
    %720 = vmatprep.subr.mxu0 0.0
    %721 = vmatpush1.msra.mxu0 0.0
    %722 = vmatprep.subr.mxu0 0.0
    %723 = vmatpush1.msra.mxu0 0.0
    %724 = vmatprep.subr.mxu0 0.0
    %725 = vmatpush1.msra.mxu0 0.0
    %726 = vmatprep.subr.mxu0 0.0
    %727 = vmatpush1.msra.mxu0 0.0
    %728 = vmatprep.subr.mxu0 0.0
    %729 = vmatpush1.msra.mxu0 0.0
    %730 = vmatprep.subr.mxu0 0.0
    %731 = vmatpush1.msra.mxu0 0.0
    %732 = vmatprep.subr.mxu0 0.0
    %733 = vmatpush1.msra.mxu0 0.0
    %734 = vmatprep.subr.mxu0 0.0
    %735 = vmatpush1.msra.mxu0 0.0
    %736 = vmatprep.subr.mxu0 0.0
    %737 = vmatpush1.msra.mxu0 0.0
    %738 = vmatprep.subr.mxu0 0.0
    %739 = vmatpush1.msra.mxu0 0.0
    %740 = vmatprep.subr.mxu0 0.0
    %741 = vmatpush1.msra.mxu0 0.0
    %742 = vmatprep.subr.mxu0 0.0
    %743 = vmatpush1.msra.mxu0 0.0
    %744 = vmatprep.subr.mxu0 0.0
    %745 = vmatpush1.msra.mxu0 0.0
    %746 = vmatprep.subr.mxu0 0.0
    %747 = vmatpush1.msra.mxu0 0.0
    %748 = vmatprep.subr.mxu0 0.0
    %749 = vmatpush1.msra.mxu0 0.0
    %750 = vmatprep.subr.mxu0 0.0
    %751 = vmatpush1.msra.mxu0 0.0
    %752 = vmatprep.subr.mxu0 0.0
    %753 = vmatpush1.msra.mxu0 0.0
    %754 = vmatprep.subr.mxu0 0.0
    %755 = vmatpush1.msra.mxu0 0.0
    %756 = vmatprep.subr.mxu0 0.0
    %757 = vmatpush1.msra.mxu0 0.0
    %758 = vmatprep.subr.mxu0 0.0
    %759 = vmatpush1.msra.mxu0 0.0
    %760 = vmatprep.subr.mxu0 0.0
    %761 = vmatpush1.msra.mxu0 0.0
    %762 = vmatprep.subr.mxu0 0.0
    %763 = vmatpush1.msra.mxu0 0.0
    %764 = vmatprep.subr.mxu0 0.0
    %765 = vmatpush1.msra.mxu0 0.0
    %766 = vmatprep.subr.mxu0 0.0
    %767 = vmatpush1.msra.mxu0 0.0
    %768 = vmatprep.subr.mxu0 0.0
    %769 = vmatpush1.msra.mxu0 0.0
    %770 = vmatprep.subr.mxu0 0.0
    %771 = vmatpush1.msra.mxu0 0.0
    %772 = vmatprep.subr.mxu0 0.0
    %773 = vmatpush1.msra.mxu0 0.0
    %774 = vmatprep.subr.mxu0 0.0
    %775 = vmatpush1.msra.mxu0 0.0
    %776 = vmatprep.mubr.f32.mxu0 0.0
    %777 = vmatmul.mubr.f32.gmra.mrb[0].mxu0 %v710
    %v778 = vpop.f32.mrb[0].mxu0
    %v779 = vadd.f32 0.0, %v778
    %v780 = vpop.f32.mrb[0].mxu0
    %781 = vdwg.mxu0
    %v783 = vrot.slane %v779, 4
    %v784 = vrot.slane %v779, 5
    %v787 = vadd.f32 %v135, %v783
    %v788 = vadd.f32 %v140, %v784
    %v789 = vxor.u32 %v787, 2147483648
    %v790 = vxor.u32 %v788, 2147483648
    %v791 = vmul.f32 %v789, 1.442695
    %v792 = vpow.pop %v791
    %v793 = vmul.f32 %v790, 1.442695
    %v794 = vpow.pop %v793
    %v795 = vadd.f32 %v792, 1.0
    %v796 = vadd.f32 %v794, 1.0
    %v797 = vrcp.pop %v795
    %v798 = vmul.f32 1.0, %v797
    %v799 = vrcp.pop %v796
    %v800 = vmul.f32 1.0, %v799
    %v801 = vtanh.pop %v787
    %v802 = vtanh.pop %v788
    %v805 = vrot.slane %v689, 7
    %v806 = vrot.slane %v690, 7
    %v809 = vmul.f32 %v798, %v805
    %v810 = vmul.f32 %v800, %v806
    %813 = vrot.lane.b32.xlu0 %v801, 64
    %v814 = vpop.permute.xlu0 %813
    %815 = vrot.lane.b32.xlu0 %v802, 64
    %v816 = vpop.permute.xlu0 %815
    %v819 = vmul.f32 %v798, %v814
    %v820 = vmul.f32 %v800, %v816
    %823 = vrot.lane.b32.xlu0 %v819, 32
    %v824 = vpop.permute.xlu0 %823
    %825 = vrot.lane.b32.xlu0 %v820, 32
    %v826 = vpop.permute.xlu0 %825
    %v829 = vadd.f32 %v809, %v824
    %v830 = vadd.f32 %v810, %v826
    %v831 = vtanh.pop %v829
    %v832 = vtanh.pop %v830
    %835 = vrot.lane.b32.xlu0 %v831, 64
    %v836 = vpop.permute.xlu0 %835
    %837 = vrot.lane.b32.xlu0 %v832, 64
    %v838 = vpop.permute.xlu0 %837
    %v841 = vmul.f32 %v798, %v836
    %v842 = vmul.f32 %v800, %v838
    %v845 = vrot.slane %v841, 4
    %v846 = vrot.slane %v842, 3
    %v847 = vsel %vm288, %v846, %v845
    %848 = vrot.lane.b32.xlu0 %v847, 32
    %v849 = vpop.permute.xlu0 %848
    %v850 = vsel %vm149, %v849, 0
    %852 = vmatprep.subr.mxu0 0.0
    %853 = vmatpush1.msra.mxu0 %v143
    %854 = vmatprep.subr.mxu0 0.0
    %855 = vmatpush1.msra.mxu0 %v144
    %856 = vmatprep.subr.mxu0 0.0
    %857 = vmatpush1.msra.mxu0 %v145
    %858 = vmatprep.subr.mxu0 0.0
    %859 = vmatpush1.msra.mxu0 %v146
    %860 = vmatprep.subr.mxu0 0.0
    %861 = vmatpush1.msra.mxu0 0.0
    %862 = vmatprep.subr.mxu0 0.0
    %863 = vmatpush1.msra.mxu0 0.0
    %864 = vmatprep.subr.mxu0 0.0
    %865 = vmatpush1.msra.mxu0 0.0
    %866 = vmatprep.subr.mxu0 0.0
    %867 = vmatpush1.msra.mxu0 0.0
    %868 = vmatprep.subr.mxu0 0.0
    %869 = vmatpush1.msra.mxu0 0.0
    %870 = vmatprep.subr.mxu0 0.0
    %871 = vmatpush1.msra.mxu0 0.0
    %872 = vmatprep.subr.mxu0 0.0
    %873 = vmatpush1.msra.mxu0 0.0
    %874 = vmatprep.subr.mxu0 0.0
    %875 = vmatpush1.msra.mxu0 0.0
    %876 = vmatprep.subr.mxu0 0.0
    %877 = vmatpush1.msra.mxu0 0.0
    %878 = vmatprep.subr.mxu0 0.0
    %879 = vmatpush1.msra.mxu0 0.0
    %880 = vmatprep.subr.mxu0 0.0
    %881 = vmatpush1.msra.mxu0 0.0
    %882 = vmatprep.subr.mxu0 0.0
    %883 = vmatpush1.msra.mxu0 0.0
    %884 = vmatprep.subr.mxu0 0.0
    %885 = vmatpush1.msra.mxu0 0.0
    %886 = vmatprep.subr.mxu0 0.0
    %887 = vmatpush1.msra.mxu0 0.0
    %888 = vmatprep.subr.mxu0 0.0
    %889 = vmatpush1.msra.mxu0 0.0
    %890 = vmatprep.subr.mxu0 0.0
    %891 = vmatpush1.msra.mxu0 0.0
    %892 = vmatprep.subr.mxu0 0.0
    %893 = vmatpush1.msra.mxu0 0.0
    %894 = vmatprep.subr.mxu0 0.0
    %895 = vmatpush1.msra.mxu0 0.0
    %896 = vmatprep.subr.mxu0 0.0
    %897 = vmatpush1.msra.mxu0 0.0
    %898 = vmatprep.subr.mxu0 0.0
    %899 = vmatpush1.msra.mxu0 0.0
    %900 = vmatprep.subr.mxu0 0.0
    %901 = vmatpush1.msra.mxu0 0.0
    %902 = vmatprep.subr.mxu0 0.0
    %903 = vmatpush1.msra.mxu0 0.0
    %904 = vmatprep.subr.mxu0 0.0
    %905 = vmatpush1.msra.mxu0 0.0
    %906 = vmatprep.subr.mxu0 0.0
    %907 = vmatpush1.msra.mxu0 0.0
    %908 = vmatprep.subr.mxu0 0.0
    %909 = vmatpush1.msra.mxu0 0.0
    %910 = vmatprep.subr.mxu0 0.0
    %911 = vmatpush1.msra.mxu0 0.0
    %912 = vmatprep.subr.mxu0 0.0
    %913 = vmatpush1.msra.mxu0 0.0
    %914 = vmatprep.subr.mxu0 0.0
    %915 = vmatpush1.msra.mxu0 0.0
    %916 = vmatprep.mubr.f32.mxu0 0.0
    %917 = vmatmul.mubr.f32.gmra.mrb[0].mxu0 %v850
    %v918 = vpop.f32.mrb[0].mxu0
    %v919 = vadd.f32 0.0, %v918
    %v920 = vpop.f32.mrb[0].mxu0
    %921 = vdwg.mxu0
    %v923 = vrot.slane %v919, 3
    %v924 = vrot.slane %v919, 4
    %v927 = vadd.f32 %v135, %v923
    %v928 = vadd.f32 %v140, %v924
    %v929 = vxor.u32 %v927, 2147483648
    %v930 = vxor.u32 %v928, 2147483648
    %v931 = vmul.f32 %v929, 1.442695
    %v932 = vpow.pop %v931
    %v933 = vmul.f32 %v930, 1.442695
    %v934 = vpow.pop %v933
    %v935 = vadd.f32 %v932, 1.0
    %v936 = vadd.f32 %v934, 1.0
    %v937 = vrcp.pop %v935
    %v938 = vmul.f32 1.0, %v937
    %v939 = vrcp.pop %v936
    %v940 = vmul.f32 1.0, %v939
    %v941 = vtanh.pop %v927
    %v942 = vtanh.pop %v928
    %v945 = vrot.slane %v829, 7
    %v946 = vrot.slane %v830, 7
    %v949 = vmul.f32 %v938, %v945
    %v950 = vmul.f32 %v940, %v946
    %953 = vrot.lane.b32.xlu0 %v941, 64
    %v954 = vpop.permute.xlu0 %953
    %955 = vrot.lane.b32.xlu0 %v942, 64
    %v956 = vpop.permute.xlu0 %955
    %v959 = vmul.f32 %v938, %v954
    %v960 = vmul.f32 %v940, %v956
    %963 = vrot.lane.b32.xlu0 %v959, 32
    %v964 = vpop.permute.xlu0 %963
    %965 = vrot.lane.b32.xlu0 %v960, 32
    %v966 = vpop.permute.xlu0 %965
    %v969 = vadd.f32 %v949, %v964
    %v970 = vadd.f32 %v950, %v966
    %v971 = vtanh.pop %v969
    %v972 = vtanh.pop %v970
    %975 = vrot.lane.b32.xlu0 %v971, 64
    %v976 = vpop.permute.xlu0 %975
    %977 = vrot.lane.b32.xlu0 %v972, 64
    %v978 = vpop.permute.xlu0 %977
    %v981 = vmul.f32 %v938, %v976
    %v982 = vmul.f32 %v940, %v978
    %v985 = vrot.slane %v981, 5
    %v986 = vrot.slane %v982, 4
    %v987 = vsel %vm288, %v986, %v985
    %988 = vrot.lane.b32.xlu0 %v987, 32
    %v989 = vpop.permute.xlu0 %988
    %v990 = vsel %vm149, %v989, 0
    %992 = vmatprep.subr.mxu0 0.0
    %993 = vmatpush1.msra.mxu0 %v143
    %994 = vmatprep.subr.mxu0 0.0
    %995 = vmatpush1.msra.mxu0 %v144
    %996 = vmatprep.subr.mxu0 0.0
    %997 = vmatpush1.msra.mxu0 %v145
    %998 = vmatprep.subr.mxu0 0.0
    %999 = vmatpush1.msra.mxu0 %v146
    %1000 = vmatprep.subr.mxu0 0.0
    %1001 = vmatpush1.msra.mxu0 0.0
    %1002 = vmatprep.subr.mxu0 0.0
    %1003 = vmatpush1.msra.mxu0 0.0
    %1004 = vmatprep.subr.mxu0 0.0
    %1005 = vmatpush1.msra.mxu0 0.0
    %1006 = vmatprep.subr.mxu0 0.0
    %1007 = vmatpush1.msra.mxu0 0.0
    %1008 = vmatprep.subr.mxu0 0.0
    %1009 = vmatpush1.msra.mxu0 0.0
    %1010 = vmatprep.subr.mxu0 0.0
    %1011 = vmatpush1.msra.mxu0 0.0
    %1012 = vmatprep.subr.mxu0 0.0
    %1013 = vmatpush1.msra.mxu0 0.0
    %1014 = vmatprep.subr.mxu0 0.0
    %1015 = vmatpush1.msra.mxu0 0.0
    %1016 = vmatprep.subr.mxu0 0.0
    %1017 = vmatpush1.msra.mxu0 0.0
    %1018 = vmatprep.subr.mxu0 0.0
    %1019 = vmatpush1.msra.mxu0 0.0
    %1020 = vmatprep.subr.mxu0 0.0
    %1021 = vmatpush1.msra.mxu0 0.0
    %1022 = vmatprep.subr.mxu0 0.0
    %1023 = vmatpush1.msra.mxu0 0.0
    %1024 = vmatprep.subr.mxu0 0.0
    %1025 = vmatpush1.msra.mxu0 0.0
    %1026 = vmatprep.subr.mxu0 0.0
    %1027 = vmatpush1.msra.mxu0 0.0
    %1028 = vmatprep.subr.mxu0 0.0
    %1029 = vmatpush1.msra.mxu0 0.0
    %1030 = vmatprep.subr.mxu0 0.0
    %1031 = vmatpush1.msra.mxu0 0.0
    %1032 = vmatprep.subr.mxu0 0.0
    %1033 = vmatpush1.msra.mxu0 0.0
    %1034 = vmatprep.subr.mxu0 0.0
    %1035 = vmatpush1.msra.mxu0 0.0
    %1036 = vmatprep.subr.mxu0 0.0
    %1037 = vmatpush1.msra.mxu0 0.0
    %1038 = vmatprep.subr.mxu0 0.0
    %1039 = vmatpush1.msra.mxu0 0.0
    %1040 = vmatprep.subr.mxu0 0.0
    %1041 = vmatpush1.msra.mxu0 0.0
    %1042 = vmatprep.subr.mxu0 0.0
    %1043 = vmatpush1.msra.mxu0 0.0
    %1044 = vmatprep.subr.mxu0 0.0
    %1045 = vmatpush1.msra.mxu0 0.0
    %1046 = vmatprep.subr.mxu0 0.0
    %1047 = vmatpush1.msra.mxu0 0.0
    %1048 = vmatprep.subr.mxu0 0.0
    %1049 = vmatpush1.msra.mxu0 0.0
    %1050 = vmatprep.subr.mxu0 0.0
    %1051 = vmatpush1.msra.mxu0 0.0
    %1052 = vmatprep.subr.mxu0 0.0
    %1053 = vmatpush1.msra.mxu0 0.0
    %1054 = vmatprep.subr.mxu0 0.0
    %1055 = vmatpush1.msra.mxu0 0.0
    %1056 = vmatprep.mubr.f32.mxu0 0.0
    %1057 = vmatmul.mubr.f32.gmra.mrb[0].mxu0 %v990
    %v1058 = vpop.f32.mrb[0].mxu0
    %v1059 = vadd.f32 0.0, %v1058
    %v1060 = vpop.f32.mrb[0].mxu0
    %1061 = vdwg.mxu0
    %v1063 = vrot.slane %v1059, 2
    %v1064 = vrot.slane %v1059, 3
    %v1067 = vadd.f32 %v135, %v1063
    %v1068 = vadd.f32 %v140, %v1064
    %v1069 = vxor.u32 %v1067, 2147483648
    %v1070 = vxor.u32 %v1068, 2147483648
    %v1071 = vmul.f32 %v1069, 1.442695
    %v1072 = vpow.pop %v1071
    %v1073 = vmul.f32 %v1070, 1.442695
    %v1074 = vpow.pop %v1073
    %v1075 = vadd.f32 %v1072, 1.0
    %v1076 = vadd.f32 %v1074, 1.0
    %v1077 = vrcp.pop %v1075
    %v1078 = vmul.f32 1.0, %v1077
    %v1079 = vrcp.pop %v1076
    %v1080 = vmul.f32 1.0, %v1079
    %v1081 = vtanh.pop %v1067
    %v1082 = vtanh.pop %v1068
    %v1085 = vrot.slane %v969, 7
    %v1086 = vrot.slane %v970, 7
    %v1089 = vmul.f32 %v1078, %v1085
    %v1090 = vmul.f32 %v1080, %v1086
    %1093 = vrot.lane.b32.xlu0 %v1081, 64
    %v1094 = vpop.permute.xlu0 %1093
    %1095 = vrot.lane.b32.xlu0 %v1082, 64
    %v1096 = vpop.permute.xlu0 %1095
    %v1099 = vmul.f32 %v1078, %v1094
    %v1100 = vmul.f32 %v1080, %v1096
    %1103 = vrot.lane.b32.xlu0 %v1099, 32
    %v1104 = vpop.permute.xlu0 %1103
    %1105 = vrot.lane.b32.xlu0 %v1100, 32
    %v1106 = vpop.permute.xlu0 %1105
    %v1109 = vadd.f32 %v1089, %v1104
    %v1110 = vadd.f32 %v1090, %v1106
    %v1111 = vtanh.pop %v1109
    %v1112 = vtanh.pop %v1110
    %1115 = vrot.lane.b32.xlu0 %v1111, 64
    %v1116 = vpop.permute.xlu0 %1115
    %1117 = vrot.lane.b32.xlu0 %v1112, 64
    %v1118 = vpop.permute.xlu0 %1117
    %v1121 = vmul.f32 %v1078, %v1116
    %v1122 = vmul.f32 %v1080, %v1118
    %v1125 = vrot.slane %v1121, 6
    %v1126 = vrot.slane %v1122, 5
    %v1127 = vsel %vm288, %v1126, %v1125
    %1128 = vrot.lane.b32.xlu0 %v1127, 32
    %v1129 = vpop.permute.xlu0 %1128
    %v1130 = vsel %vm149, %v1129, 0
    %1132 = vmatprep.subr.mxu0 0.0
    %1133 = vmatpush1.msra.mxu0 %v143
    %1134 = vmatprep.subr.mxu0 0.0
    %1135 = vmatpush1.msra.mxu0 %v144
    %1136 = vmatprep.subr.mxu0 0.0
    %1137 = vmatpush1.msra.mxu0 %v145
    %1138 = vmatprep.subr.mxu0 0.0
    %1139 = vmatpush1.msra.mxu0 %v146
    %1140 = vmatprep.subr.mxu0 0.0
    %1141 = vmatpush1.msra.mxu0 0.0
    %1142 = vmatprep.subr.mxu0 0.0
    %1143 = vmatpush1.msra.mxu0 0.0
    %1144 = vmatprep.subr.mxu0 0.0
    %1145 = vmatpush1.msra.mxu0 0.0
    %1146 = vmatprep.subr.mxu0 0.0
    %1147 = vmatpush1.msra.mxu0 0.0
    %1148 = vmatprep.subr.mxu0 0.0
    %1149 = vmatpush1.msra.mxu0 0.0
    %1150 = vmatprep.subr.mxu0 0.0
    %1151 = vmatpush1.msra.mxu0 0.0
    %1152 = vmatprep.subr.mxu0 0.0
    %1153 = vmatpush1.msra.mxu0 0.0
    %1154 = vmatprep.subr.mxu0 0.0
    %1155 = vmatpush1.msra.mxu0 0.0
    %1156 = vmatprep.subr.mxu0 0.0
    %1157 = vmatpush1.msra.mxu0 0.0
    %1158 = vmatprep.subr.mxu0 0.0
    %1159 = vmatpush1.msra.mxu0 0.0
    %1160 = vmatprep.subr.mxu0 0.0
    %1161 = vmatpush1.msra.mxu0 0.0
    %1162 = vmatprep.subr.mxu0 0.0
    %1163 = vmatpush1.msra.mxu0 0.0
    %1164 = vmatprep.subr.mxu0 0.0
    %1165 = vmatpush1.msra.mxu0 0.0
    %1166 = vmatprep.subr.mxu0 0.0
    %1167 = vmatpush1.msra.mxu0 0.0
    %1168 = vmatprep.subr.mxu0 0.0
    %1169 = vmatpush1.msra.mxu0 0.0
    %1170 = vmatprep.subr.mxu0 0.0
    %1171 = vmatpush1.msra.mxu0 0.0
    %1172 = vmatprep.subr.mxu0 0.0
    %1173 = vmatpush1.msra.mxu0 0.0
    %1174 = vmatprep.subr.mxu0 0.0
    %1175 = vmatpush1.msra.mxu0 0.0
    %1176 = vmatprep.subr.mxu0 0.0
    %1177 = vmatpush1.msra.mxu0 0.0
    %1178 = vmatprep.subr.mxu0 0.0
    %1179 = vmatpush1.msra.mxu0 0.0
    %1180 = vmatprep.subr.mxu0 0.0
    %1181 = vmatpush1.msra.mxu0 0.0
    %1182 = vmatprep.subr.mxu0 0.0
    %1183 = vmatpush1.msra.mxu0 0.0
    %1184 = vmatprep.subr.mxu0 0.0
    %1185 = vmatpush1.msra.mxu0 0.0
    %1186 = vmatprep.subr.mxu0 0.0
    %1187 = vmatpush1.msra.mxu0 0.0
    %1188 = vmatprep.subr.mxu0 0.0
    %1189 = vmatpush1.msra.mxu0 0.0
    %1190 = vmatprep.subr.mxu0 0.0
    %1191 = vmatpush1.msra.mxu0 0.0
    %1192 = vmatprep.subr.mxu0 0.0
    %1193 = vmatpush1.msra.mxu0 0.0
    %1194 = vmatprep.subr.mxu0 0.0
    %1195 = vmatpush1.msra.mxu0 0.0
    %1196 = vmatprep.mubr.f32.mxu0 0.0
    %1197 = vmatmul.mubr.f32.gmra.mrb[0].mxu0 %v1130
    %v1198 = vpop.f32.mrb[0].mxu0
    %v1199 = vadd.f32 0.0, %v1198
    %v1200 = vpop.f32.mrb[0].mxu0
    %1201 = vdwg.mxu0
    %v1203 = vrot.slane %v1199, 1
    %v1204 = vrot.slane %v1199, 2
    %v1207 = vadd.f32 %v135, %v1203
    %v1208 = vadd.f32 %v140, %v1204
    %v1209 = vxor.u32 %v1207, 2147483648
    %v1210 = vxor.u32 %v1208, 2147483648
    %v1211 = vmul.f32 %v1209, 1.442695
    %v1212 = vpow.pop %v1211
    %v1213 = vmul.f32 %v1210, 1.442695
    %v1214 = vpow.pop %v1213
    %v1215 = vadd.f32 %v1212, 1.0
    %v1216 = vadd.f32 %v1214, 1.0
    %v1217 = vrcp.pop %v1215
    %v1218 = vmul.f32 1.0, %v1217
    %v1219 = vrcp.pop %v1216
    %v1220 = vmul.f32 1.0, %v1219
    %v1221 = vtanh.pop %v1207
    %v1222 = vtanh.pop %v1208
    %v1225 = vrot.slane %v1109, 7
    %v1226 = vrot.slane %v1110, 7
    %v1229 = vmul.f32 %v1218, %v1225
    %v1230 = vmul.f32 %v1220, %v1226
    %1233 = vrot.lane.b32.xlu0 %v1221, 64
    %v1234 = vpop.permute.xlu0 %1233
    %1235 = vrot.lane.b32.xlu0 %v1222, 64
    %v1236 = vpop.permute.xlu0 %1235
    %v1239 = vmul.f32 %v1218, %v1234
    %v1240 = vmul.f32 %v1220, %v1236
    %1243 = vrot.lane.b32.xlu0 %v1239, 32
    %v1244 = vpop.permute.xlu0 %1243
    %1245 = vrot.lane.b32.xlu0 %v1240, 32
    %v1246 = vpop.permute.xlu0 %1245
    %v1249 = vadd.f32 %v1229, %v1244
    %v1250 = vadd.f32 %v1230, %v1246
    %v1251 = vtanh.pop %v1249
    %v1252 = vtanh.pop %v1250
    %1255 = vrot.lane.b32.xlu0 %v1251, 64
    %v1256 = vpop.permute.xlu0 %1255
    %1257 = vrot.lane.b32.xlu0 %v1252, 64
    %v1258 = vpop.permute.xlu0 %1257
    %v1261 = vmul.f32 %v1218, %v1256
    %v1262 = vmul.f32 %v1220, %v1258
    %vm1263 = vcmask 1040384
    %v1264 = vsel %vm1263, %v283, %v422
    %v1265 = vsel %vm1263, %v284, %v423
    %vm1266 = vcmask 1041408
    %v1267 = vsel %vm1266, %v1264, %v561
    %v1268 = vsel %vm1266, %v1265, %v562
    %vm1269 = vcmask 1042432
    %v1270 = vsel %vm1269, %v1267, %v701
    %v1271 = vsel %vm1269, %v1268, %v702
    %vm1272 = vcmask 1043456
    %v1273 = vsel %vm1272, %v1270, %v841
    %v1274 = vsel %vm1272, %v1271, %v842
    %vm1275 = vcmask 1044480
    %v1276 = vsel %vm1275, %v1273, %v981
    %v1277 = vsel %vm1275, %v1274, %v982
    %vm1278 = vcmask 1045504
    %v1279 = vsel %vm1278, %v1276, %v1121
    %v1280 = vsel %vm1278, %v1277, %v1122
    %vm1281 = vcmask 1046528
    %v1282 = vsel %vm1281, %v1279, %v1261
    %v1283 = vsel %vm1281, %v1280, %v1262
    %v1284 = vld [vmem:[%s6] sm:$0xff]
    %v1285 = vld [vmem:[%s6 + $0x8] sm:$0xff]
    %v1286 = vld [vmem:[%s6 + $0x10] sm:$0xff]
    %v1287 = vld [vmem:[%s6 + $0x18] sm:$0xff]
    %v1288 = vld [vmem:[#allocation2] sm:$0x1]
    %v1290 = vlaneseq
    %v1291 = vshrl.u32 %v1290, 7
    %v1292 = vsub.s32 0, %v1291
    %v1293 = vrot.slane %v1288, %v1292
    %1297 = vrot.lane.b32.xlu0 %v1282, 32
    %v1298 = vpop.permute.xlu0 %1297
    %1299 = vrot.lane.b32.xlu0 %v1283, 32
    %v1300 = vpop.permute.xlu0 %1299
    %v1301 = vsel %vm149, %v1298, 0
    %v1303 = vsel %vm149, %v1300, 0
    %1305 = vmatprep.subr.mxu0 0.0
    %1306 = vmatpush1.msra.mxu0 %v1284
    %1307 = vmatprep.subr.mxu0 0.0
    %1308 = vmatpush1.msra.mxu0 %v1285
    %1309 = vmatprep.subr.mxu0 0.0
    %1310 = vmatpush1.msra.mxu0 %v1286
    %1311 = vmatprep.subr.mxu0 0.0
    %1312 = vmatpush1.msra.mxu0 %v1287
    %1313 = vmatprep.subr.mxu0 0.0
    %1314 = vmatpush1.msra.mxu0 0.0
    %1315 = vmatprep.subr.mxu0 0.0
    %1316 = vmatpush1.msra.mxu0 0.0
    %1317 = vmatprep.subr.mxu0 0.0
    %1318 = vmatpush1.msra.mxu0 0.0
    %1319 = vmatprep.subr.mxu0 0.0
    %1320 = vmatpush1.msra.mxu0 0.0
    %1321 = vmatprep.subr.mxu0 0.0
    %1322 = vmatpush1.msra.mxu0 0.0
    %1323 = vmatprep.subr.mxu0 0.0
    %1324 = vmatpush1.msra.mxu0 0.0
    %1325 = vmatprep.subr.mxu0 0.0
    %1326 = vmatpush1.msra.mxu0 0.0
    %1327 = vmatprep.subr.mxu0 0.0
    %1328 = vmatpush1.msra.mxu0 0.0
    %1329 = vmatprep.subr.mxu0 0.0
    %1330 = vmatpush1.msra.mxu0 0.0
    %1331 = vmatprep.subr.mxu0 0.0
    %1332 = vmatpush1.msra.mxu0 0.0
    %1333 = vmatprep.subr.mxu0 0.0
    %1334 = vmatpush1.msra.mxu0 0.0
    %1335 = vmatprep.subr.mxu0 0.0
    %1336 = vmatpush1.msra.mxu0 0.0
    %1337 = vmatprep.subr.mxu0 0.0
    %1338 = vmatpush1.msra.mxu0 0.0
    %1339 = vmatprep.subr.mxu0 0.0
    %1340 = vmatpush1.msra.mxu0 0.0
    %1341 = vmatprep.subr.mxu0 0.0
    %1342 = vmatpush1.msra.mxu0 0.0
    %1343 = vmatprep.subr.mxu0 0.0
    %1344 = vmatpush1.msra.mxu0 0.0
    %1345 = vmatprep.subr.mxu0 0.0
    %1346 = vmatpush1.msra.mxu0 0.0
    %1347 = vmatprep.subr.mxu0 0.0
    %1348 = vmatpush1.msra.mxu0 0.0
    %1349 = vmatprep.subr.mxu0 0.0
    %1350 = vmatpush1.msra.mxu0 0.0
    %1351 = vmatprep.subr.mxu0 0.0
    %1352 = vmatpush1.msra.mxu0 0.0
    %1353 = vmatprep.subr.mxu0 0.0
    %1354 = vmatpush1.msra.mxu0 0.0
    %1355 = vmatprep.subr.mxu0 0.0
    %1356 = vmatpush1.msra.mxu0 0.0
    %1357 = vmatprep.subr.mxu0 0.0
    %1358 = vmatpush1.msra.mxu0 0.0
    %1359 = vmatprep.subr.mxu0 0.0
    %1360 = vmatpush1.msra.mxu0 0.0
    %1361 = vmatprep.subr.mxu0 0.0
    %1362 = vmatpush1.msra.mxu0 0.0
    %1363 = vmatprep.subr.mxu0 0.0
    %1364 = vmatpush1.msra.mxu0 0.0
    %1365 = vmatprep.subr.mxu0 0.0
    %1366 = vmatpush1.msra.mxu0 0.0
    %1367 = vmatprep.subr.mxu0 0.0
    %1368 = vmatpush1.msra.mxu0 0.0
    %1369 = vmatprep.mubr.f32.mxu0 0.0
    %1370 = vmatmul.mubr.f32.gmra.mrb[0].mxu0 %v1301
    %v1371 = vpop.f32.mrb[0].mxu0
    %v1372 = vadd.f32 %v1293, %v1371
    %v1373 = vpop.f32.mrb[0].mxu0
    %1374 = vmatprep.mubr.f32.mxu0 0.0
    %1375 = vmatmul.mubr.f32.gmra.mrb[0].mxu0 %v1303
    %v1376 = vpop.f32.mrb[0].mxu0
    %v1377 = vadd.f32 %v1293, %v1376
    %v1378 = vpop.f32.mrb[0].mxu0
    %1379 = vdwg.mxu0
    %vm1380 = vcmask 7168
    %1381 = vst.msk [vmem:[%s8] sm:$0xff] %vm1380, %v1372
    %1382 = vst.msk [vmem:[%s8 + $0x8] sm:$0xff] %vm1380, %v1377
    %v1385 = vrot.slane %v1262, 7
    %1386 = vrot.lane.b32.xlu0 %v1261, 32
    %v1387 = vpop.permute.xlu0 %1386
    %1388 = vrot.lane.b32.xlu0 %v1385, 32
    %v1389 = vpop.permute.xlu0 %1388
    %vm1392 = vcmask 261127
    %1393 = vst.msk [vmem:[#allocation6 - $0x7] sm:$0x80] %vm1392, %v1387
    %vm1394 = vcmask 253952
    %1395 = vst.msk [vmem:[#allocation6 + $0x1] sm:$0x1] %vm1394, %v1389
    %v1398 = vrot.slane %v1250, 7
    %1399 = vrot.lane.b32.xlu0 %v1249, 96
    %v1400 = vpop.permute.xlu0 %1399
    %1401 = vrot.lane.b32.xlu0 %v1398, 96
    %v1402 = vpop.permute.xlu0 %1401
    %1405 = vst.msk [vmem:[#allocation7 - $0x7] sm:$0x80] %vm1392, %v1400
    %1406 = vst.msk [vmem:[#allocation7 + $0x1] sm:$0x1] %vm1394, %v1402
    // Predicated region
    $region38: #{value_network_forward.1} parent=1 // pred_check
      _
    $region39: #{value_network_forward.1} parent=1 // pred_check_branch
      %1408 = sbr.rel (0) target = $region41
    $region40: #{value_network_forward.1} parent=1 // pred_region
      _
    $region41: #{value_network_forward.1} parent=1 // pred_fallthru
      _
    // Predicated region
    $region42: #{value_network_forward.1} parent=1 // pred_check
      _
    $region43: #{value_network_forward.1} parent=1 // pred_check_branch
      %1410 = sbr.rel (0) target = $region45
    $region44: #{value_network_forward.1} parent=1 // pred_region
      %s1412 = ssub.s32 32, 32
      %1413 = vsyncadd [#allocation5], %s1412
      %s1415 = sshll.u32 [#allocation6], 4
      %s1416 = int_to_ptr.vmem [resolvable:$true] %s1415
      %1418 = dma.vmem_to_hbm [thread:$0]  %s1416, 32, %s9, [#allocation5]
    $region45: #{value_network_forward.1} parent=1 // pred_fallthru
      _
    // Predicated region
    $region46: #{value_network_forward.1} parent=1 // pred_check
      _
    $region47: #{value_network_forward.1} parent=1 // pred_check_branch
      %1420 = sbr.rel (0) target = $region49
    $region48: #{value_network_forward.1} parent=1 // pred_region
      %s1422 = ssub.s32 32, 32
      %1423 = vsyncadd [#allocation8], %s1422
      %s1425 = sshll.u32 [#allocation7], 4
      %s1426 = int_to_ptr.vmem [resolvable:$true] %s1425
      %1428 = dma.vmem_to_hbm [thread:$0]  %s1426, 32, %s10, [#allocation8]
    $region49: #{value_network_forward.1} parent=1 // pred_fallthru
      _
    // Predicated region
    $region50: #{value_network_forward.1} parent=1 // pred_check
      _
    $region51: #{value_network_forward.1} parent=1 // pred_check_branch
      %1430 = sbr.rel (0) target = $region53
    $region52: #{value_network_forward.1} parent=1 // pred_region
      _
    $region53: #{value_network_forward.1} parent=1 // pred_fallthru
      _
    // Predicated region
    $region54: #{value_network_forward.1} parent=1 // pred_check
      _
    $region55: #{value_network_forward.1} parent=1 // pred_check_branch
      %1432 = sbr.rel (0) target = $region57
    $region56: #{value_network_forward.1} parent=1 // pred_region
      %1433 = dma.done [#allocation5], 32
    $region57: #{value_network_forward.1} parent=1 // pred_fallthru
      _
    // Predicated region
    $region58: #{value_network_forward.1} parent=1 // pred_check
      _
    $region59: #{value_network_forward.1} parent=1 // pred_check_branch
      %1435 = sbr.rel (0) target = $region61
    $region60: #{value_network_forward.1} parent=1 // pred_region
      %1436 = dma.done [#allocation8], 32
    $region61: #{value_network_forward.1} parent=1 // pred_fallthru
      _
    %1437 = vsyncpa [#allocation4], 1
    %1438 = vsyncpa [#allocation5], 1
    %1439 = vsyncpa [#allocation8], 1

</llo_original>
